<compile_context>
chip_gen: v7x
topology: tpu7x:2x2x1
jax: 0.10.0
libtpu: 0.0.40
codegen_flags: <defaults>
</compile_context>

<pallas_src>
import functools
import math

import jax
import jax.numpy as jnp
from jax import lax
from jax.experimental import pallas as pl
from jax.experimental.pallas import tpu as pltpu

NUM_HEADS = 8
HIDDEN = 64
HEAD_DIM = HIDDEN // NUM_HEADS   # must equal NUM_HEADS for the reference broadcast
SEQ = 8
BATCH = 2


# ---------------------------------------------------------------------------
# Single fused kernel: packed QKV projection -> scores -> softmax -> p * v
# ---------------------------------------------------------------------------
def _mha_fused_kernel(x_ref, w_ref, b_ref, o_ref, *, scale, num_heads, head_dim):
    n, e = o_ref.shape                         # (N, E) = (16, 64)

    # ---- one wide MXU pass for all three projections ----------------------
    # x_ref: (3N, E) rows = [query; key; value]
    # w_ref: (3E, E) rows = [Wq; Wk; Wv], PyTorch (out, in) layout (never transposed)
    # contracting dim 1 of both => res[i, o] = sum_e x[i, e] * W[o, e]  (x @ W.T)
    res = lax.dot_general(
        x_ref[...], w_ref[...],
        dimension_numbers=(((1,), (1,)), ((), ())),
        preferred_element_type=jnp.float32)    # (3N, 3E) = (48, 192)

    bias = b_ref[...]                          # (3, E)
    q = res[0:n,       0:e      ] + bias[0:1, :]   # query rows  @ Wq.T + bq
    k = res[n:2 * n,   e:2 * e  ] + bias[1:2, :]   # key rows    @ Wk.T + bk
    v = res[2 * n:3 * n, 2 * e:3 * e] + bias[2:3, :]   # value rows @ Wv.T + bv

    qh = q.reshape(n, num_heads, head_dim)     # (N, H, D)
    kh = k.reshape(n, num_heads, head_dim)
    vh = v.reshape(n, num_heads, head_dim)

    # ---- per-(batch, seq)-row HxH scores (reference scale = 1/sqrt(hidden)) ----
    s = jnp.einsum("nhd,ngd->nhg", qh, kh,
                   preferred_element_type=jnp.float32) * scale   # (N, H, H)

    # ---- numerically-stable f32 softmax; exact EUP reciprocal + VPU mul ----
    s = s - jnp.max(s, axis=-1, keepdims=True)
    p = jnp.exp(s)
    p = p * pl.reciprocal(jnp.sum(p, axis=-1, keepdims=True), approx=False)
    # TODO(synk): dropout_layer skipped (identity in eval mode).

    # ---- quirky reference semantics: ELEMENTWISE p * value (needs H == D) ----
    o_ref[...] = (p * vh).reshape(n, e)


# ---------------------------------------------------------------------------
# Param packing (done ONCE, outside the per-call path)
# ---------------------------------------------------------------------------
def pack_params(params):
    # Keep PyTorch (out, in) layout; no transposes, just a row-wise concat.
    w_packed = jnp.concatenate(
        [params["wq"], params["wk"], params["wv"]], axis=0)        # (3E, E)
    b_packed = jnp.stack(
        [params["bq"], params["bk"], params["bv"]], axis=0)        # (3, E)
    return w_packed, b_packed


# ---------------------------------------------------------------------------
# Wrapper
# ---------------------------------------------------------------------------
@jax.jit
def multi_head_attention(query, key, value, w_packed, b_packed):
    B, S, E = query.shape
    H = NUM_HEADS
    D = E // H
    assert D == H, "reference module's elementwise `scores * value` needs head_dim == num_heads"
    N = B * S
    scale = 1.0 / math.sqrt(E)   # reference divides by sqrt(hidden_size), not sqrt(head_dim)

    # One lane-dense (3N, E) input slab -> single HBM->VMEM transfer.
    x_packed = jnp.concatenate(
        [query.reshape(N, E), key.reshape(N, E), value.reshape(N, E)], axis=0)

    vmem = pltpu.MemorySpace.VMEM
    out = pl.pallas_call(
        functools.partial(_mha_fused_kernel, scale=scale, num_heads=H, head_dim=D),
        out_shape=jax.ShapeDtypeStruct((N, E), jnp.float32),
        in_specs=[pl.BlockSpec(memory_space=vmem),
                  pl.BlockSpec(memory_space=vmem),
                  pl.BlockSpec(memory_space=vmem)],
        out_specs=pl.BlockSpec(memory_space=vmem),
    )(x_packed, w_packed, b_packed)

    return out.reshape(B, S, E)


# ---------------------------------------------------------------------------
# Pure-JAX reference (mirrors the PyTorch forward exactly, dropout = identity)
# ---------------------------------------------------------------------------
def mha_reference(query, key, value, params):
    B, S, E = query.shape
    H = NUM_HEADS
    D = E // H
    q = query @ params["wq"].T + params["bq"]
    k = key @ params["wk"].T + params["bk"]
    v = value @ params["wv"].T + params["bv"]
    q = q.reshape(B, -1, H, D)
    k = k.reshape(B, -1, H, D)
    v = v.reshape(B, -1, H, D)
    s = jnp.einsum("bshd,bsgd->bshg", q, k) / math.sqrt(E)
    p = jax.nn.softmax(s, axis=-1)
    out = p * v
    return out.reshape(B, -1, E)


if __name__ == "__main__":
    root = jax.random.PRNGKey(0)
    ks = jax.random.split(root, 9)

    query = jax.random.normal(ks[0], (BATCH, SEQ, HIDDEN), jnp.float32)
    key_in = jax.random.normal(ks[1], (BATCH, SEQ, HIDDEN), jnp.float32)
    value = jax.random.normal(ks[2], (BATCH, SEQ, HIDDEN), jnp.float32)

    # Deterministic synthetic parameters (PyTorch Linear shapes: W=(out,in), b=(out,))
    params = {
        "wq": jax.random.normal(ks[3], (HIDDEN, HIDDEN), jnp.float32) * 0.05,
        "bq": jax.random.normal(ks[4], (HIDDEN,), jnp.float32) * 0.05,
        "wk": jax.random.normal(ks[5], (HIDDEN, HIDDEN), jnp.float32) * 0.05,
        "bk": jax.random.normal(ks[6], (HIDDEN,), jnp.float32) * 0.05,
        "wv": jax.random.normal(ks[7], (HIDDEN, HIDDEN), jnp.float32) * 0.05,
        "bv": jax.random.normal(ks[8], (HIDDEN,), jnp.float32) * 0.05,
    }

    # Pack parameters once, outside the per-call path.
    w_packed, b_packed = pack_params(params)
    w_packed, b_packed = jax.block_until_ready((w_packed, b_packed))

    out = multi_head_attention(query, key_in, value, w_packed, b_packed)
    out = jax.block_until_ready(out)

    ref = mha_reference(query, key_in, value, params)
    err = float(jnp.max(jnp.abs(out - ref)))
    assert out.shape == (BATCH, SEQ, HIDDEN)
    assert err < 1e-4, f"max abs error too large: {err}"

    print("KERNEL_OK")
</pallas_src>

<mosaic_0001>
module attributes {stable_mosaic.version = 11 : i64} {
  func.func @_mha_fused_kernel(%arg0: memref<48x64xf32, #tpu.memory_space<vmem>>, %arg1: memref<192x64xf32, #tpu.memory_space<vmem>>, %arg2: memref<3x64xf32, #tpu.memory_space<vmem>>, %arg3: memref<16x64xf32, #tpu.memory_space<vmem>>) attributes {dimension_semantics = [], scalar_prefetch = 0 : i64, scratch_operands = 0 : i64, tpu.core_type = #tpu.core_type<tc>} {
    %c0 = arith.constant 0 : index
    %c0_0 = arith.constant 0 : index
    %0 = vector.load %arg0[%c0, %c0_0] : memref<48x64xf32, #tpu.memory_space<vmem>>, vector<48x64xf32>
    %c0_1 = arith.constant 0 : index
    %c0_2 = arith.constant 0 : index
    %1 = vector.load %arg1[%c0_1, %c0_2] : memref<192x64xf32, #tpu.memory_space<vmem>>, vector<192x64xf32>
    %cst = arith.constant dense<0.000000e+00> : vector<48x192xf32>
    %2 = tpu.matmul %0, %1, %cst {dimension_numbers = #tpu.dot_dimension_numbers<[1], [1], [0], [0], [0, 0, 1, 0], [], []>} : vector<48x64xf32>, vector<192x64xf32>, vector<48x192xf32> -> vector<48x192xf32>
    %c0_3 = arith.constant 0 : index
    %c0_4 = arith.constant 0 : index
    %3 = vector.load %arg2[%c0_3, %c0_4] : memref<3x64xf32, #tpu.memory_space<vmem>>, vector<3x64xf32>
    %4 = vector.extract_strided_slice %2 {offsets = [0, 0], sizes = [16, 64], strides = [1, 1]} : vector<48x192xf32> to vector<16x64xf32>
    %5 = vector.extract_strided_slice %3 {offsets = [0, 0], sizes = [1, 64], strides = [1, 1]} : vector<3x64xf32> to vector<1x64xf32>
    %6 = vector.broadcast %5 : vector<1x64xf32> to vector<16x64xf32>
    %7 = arith.addf %4, %6 : vector<16x64xf32>
    %8 = vector.extract_strided_slice %2 {offsets = [16, 64], sizes = [16, 64], strides = [1, 1]} : vector<48x192xf32> to vector<16x64xf32>
    %9 = vector.extract_strided_slice %3 {offsets = [1, 0], sizes = [1, 64], strides = [1, 1]} : vector<3x64xf32> to vector<1x64xf32>
    %10 = vector.broadcast %9 : vector<1x64xf32> to vector<16x64xf32>
    %11 = arith.addf %8, %10 : vector<16x64xf32>
    %12 = vector.extract_strided_slice %2 {offsets = [32, 128], sizes = [16, 64], strides = [1, 1]} : vector<48x192xf32> to vector<16x64xf32>
    %13 = vector.extract_strided_slice %3 {offsets = [2, 0], sizes = [1, 64], strides = [1, 1]} : vector<3x64xf32> to vector<1x64xf32>
    %14 = vector.broadcast %13 : vector<1x64xf32> to vector<16x64xf32>
    %15 = arith.addf %12, %14 : vector<16x64xf32>
    %16 = vector.shape_cast %7 : vector<16x64xf32> to vector<16x8x8xf32>
    %17 = vector.shape_cast %11 : vector<16x64xf32> to vector<16x8x8xf32>
    %18 = vector.shape_cast %15 : vector<16x64xf32> to vector<16x8x8xf32>
    "tpu.trace_start"() <{level = 10 : i32, message = "nhd,ngd->nhg"}> : () -> ()
    %cst_5 = arith.constant dense<0.000000e+00> : vector<16x8x8xf32>
    %19 = tpu.matmul %16, %17, %cst_5 {dimension_numbers = #tpu.dot_dimension_numbers<[2], [2], [1], [1], [0, 0, 0, 1, 1, 1], [0], [0]>} : vector<16x8x8xf32>, vector<16x8x8xf32>, vector<16x8x8xf32> -> vector<16x8x8xf32>
    "tpu.trace_stop"() : () -> ()
    %cst_6 = arith.constant 1.250000e-01 : f32
    %20 = vector.broadcast %cst_6 : f32 to vector<16x8x8xf32>
    %21 = arith.mulf %19, %20 : vector<16x8x8xf32>
    %cst_7 = arith.constant dense<0xFF800000> : vector<16x8xf32>
    %22 = vector.multi_reduction <maximumf>, %21, %cst_7 [2] : vector<16x8x8xf32> to vector<16x8xf32>
    %23 = vector.shape_cast %22 : vector<16x8xf32> to vector<16x8x1xf32>
    %24 = vector.broadcast %23 : vector<16x8x1xf32> to vector<16x8x8xf32>
    %25 = arith.subf %21, %24 : vector<16x8x8xf32>
    %26 = math.exp %25 : vector<16x8x8xf32>
    %cst_8 = arith.constant dense<0.000000e+00> : vector<16x8xf32>
    %27 = vector.multi_reduction <add>, %26, %cst_8 [2] : vector<16x8x8xf32> to vector<16x8xf32>
    %28 = vector.shape_cast %27 : vector<16x8xf32> to vector<16x8x1xf32>
    %29 = tpu.reciprocal %28 : vector<16x8x1xf32> -> vector<16x8x1xf32>
    %30 = vector.broadcast %29 : vector<16x8x1xf32> to vector<16x8x8xf32>
    %31 = arith.mulf %26, %30 : vector<16x8x8xf32>
    %32 = arith.mulf %31, %18 : vector<16x8x8xf32>
    %33 = vector.shape_cast %32 : vector<16x8x8xf32> to vector<16x64xf32>
    %c0_9 = arith.constant 0 : index
    %c0_10 = arith.constant 0 : index
    %34 = vector.load %arg3[%c0_9, %c0_10] : memref<16x64xf32, #tpu.memory_space<vmem>>, vector<16x64xf32>
    tpu.vector_store %arg3[%c0_9, %c0_10], %33 {strides = array<i32>} : memref<16x64xf32, #tpu.memory_space<vmem>>, vector<16x64xf32>,
    return
  }
}

</mosaic_0001>

<llo_original>
// kernel: multi_head_attention.1
$region0: #{multi_head_attention.1}
  #allocation0 [shape = 'u32[]', space=smem, size = 0x4, offset = 0x4, fixed_abs, tag = 'smem constant byte address 0x4 - core index']
  #allocation1 [shape = 'u32[144,128]{1,0:T(1,128)}', space=vmem, size = 0x12000, scoped, tag = 'internal scratch']
  %s0 = inlined_call_operand.vmem [shape: f32[48,64], index: 0, kind: input, shape index: {}]
  %s1 = inlined_call_operand.vmem [shape: f32[192,64], index: 1, kind: input, shape index: {}]
  %s2 = inlined_call_operand.vmem [shape: f32[3,64], index: 2, kind: input, shape index: {}]
  %s3 = inlined_call_operand.hbm [shape: f32[16,64], index: 3, kind: output, shape index: {}]
  %s4 = sld [smem:[#allocation0]]
  $region22: #{multi_head_attention.1} parent=0
    _
  %s6 = ssub.s32 1, %s4
  %s7 = scalar_select 0, %s6, %s4
  $region1: #{multi_head_attention.1} parent=0
    #allocation2 [shape = 'u8[8192]{0}', space=vmem, size = 0x2000, scoped, tag = 'output window, operand 0, single buffered']
    #allocation3 [shape = 's32[1]{0}', space=sflag, size = 0x4, scoped, tag = 'scoped memory for multi_head_attention.1']
    %8 = vsyncpa [#allocation3], 0
    // Predicated region
    $region2: #{multi_head_attention.1} parent=1 // pred_check
      _
    $region3: #{multi_head_attention.1} parent=1 // pred_check_branch
      %10 = sbr.rel (0) target = $region5
    $region4: #{multi_head_attention.1} parent=1 // pred_region
      _
    $region5: #{multi_head_attention.1} parent=1 // pred_fallthru
      _
    // Predicated region
    $region6: #{multi_head_attention.1} parent=1 // pred_check
      _
    $region7: #{multi_head_attention.1} parent=1 // pred_check_branch
      %12 = sbr.rel (0) target = $region9
    $region8: #{multi_head_attention.1} parent=1 // pred_region
      _
    $region9: #{multi_head_attention.1} parent=1 // pred_fallthru
      _
    // Predicated region
    $region10: #{multi_head_attention.1} parent=1 // pred_check
      _
    $region11: #{multi_head_attention.1} parent=1 // pred_check_branch
      %14 = sbr.rel (0) target = $region13
    $region12: #{multi_head_attention.1} parent=1 // pred_region
      _
    $region13: #{multi_head_attention.1} parent=1 // pred_fallthru
      _
    %v15 = vld [vmem:[%s0] sm:$0xff]
    %v16 = vld [vmem:[%s0 + $0x8] sm:$0xff]
    %v17 = vld [vmem:[%s0 + $0x10] sm:$0xff]
    %v18 = vld [vmem:[%s0 + $0x18] sm:$0xff]
    %v19 = vld [vmem:[%s0 + $0x20] sm:$0xff]
    %v20 = vld [vmem:[%s0 + $0x28] sm:$0xff]
    %v21 = vld [vmem:[%s1] sm:$0xff]
    %v22 = vld [vmem:[%s1 + $0x8] sm:$0xff]
    %v23 = vld [vmem:[%s1 + $0x10] sm:$0xff]
    %v24 = vld [vmem:[%s1 + $0x18] sm:$0xff]
    %v25 = vld [vmem:[%s1 + $0x20] sm:$0xff]
    %v26 = vld [vmem:[%s1 + $0x28] sm:$0xff]
    %v27 = vld [vmem:[%s1 + $0x30] sm:$0xff]
    %v28 = vld [vmem:[%s1 + $0x38] sm:$0xff]
    %v29 = vld [vmem:[%s1 + $0x40] sm:$0xff]
    %v30 = vld [vmem:[%s1 + $0x48] sm:$0xff]
    %v31 = vld [vmem:[%s1 + $0x50] sm:$0xff]
    %v32 = vld [vmem:[%s1 + $0x58] sm:$0xff]
    %v33 = vld [vmem:[%s1 + $0x60] sm:$0xff]
    %v34 = vld [vmem:[%s1 + $0x68] sm:$0xff]
    %v35 = vld [vmem:[%s1 + $0x70] sm:$0xff]
    %v36 = vld [vmem:[%s1 + $0x78] sm:$0xff]
    %v37 = vld [vmem:[%s1 + $0x80] sm:$0xff]
    %v38 = vld [vmem:[%s1 + $0x88] sm:$0xff]
    %v39 = vld [vmem:[%s1 + $0x90] sm:$0xff]
    %v40 = vld [vmem:[%s1 + $0x98] sm:$0xff]
    %v41 = vld [vmem:[%s1 + $0xa0] sm:$0xff]
    %v42 = vld [vmem:[%s1 + $0xa8] sm:$0xff]
    %v43 = vld [vmem:[%s1 + $0xb0] sm:$0xff]
    %v44 = vld [vmem:[%s1 + $0xb8] sm:$0xff]
    %vm45 = vcmask 523264
    %v47 = vsel %vm45, %v15, 0
    %v50 = vsel %vm45, %v16, 0
    %v53 = vsel %vm45, %v17, 0
    %v56 = vsel %vm45, %v18, 0
    %v59 = vsel %vm45, %v19, 0
    %v62 = vsel %vm45, %v20, 0
    %v65 = vsel %vm45, %v21, 0
    %v68 = vsel %vm45, %v22, 0
    %v71 = vsel %vm45, %v23, 0
    %v74 = vsel %vm45, %v24, 0
    %v77 = vsel %vm45, %v25, 0
    %v80 = vsel %vm45, %v26, 0
    %v83 = vsel %vm45, %v27, 0
    %v86 = vsel %vm45, %v28, 0
    %v89 = vsel %vm45, %v29, 0
    %v92 = vsel %vm45, %v30, 0
    %v95 = vsel %vm45, %v31, 0
    %v98 = vsel %vm45, %v32, 0
    %v101 = vsel %vm45, %v33, 0
    %v104 = vsel %vm45, %v34, 0
    %v107 = vsel %vm45, %v35, 0
    %v110 = vsel %vm45, %v36, 0
    %v113 = vsel %vm45, %v37, 0
    %v116 = vsel %vm45, %v38, 0
    %v119 = vsel %vm45, %v39, 0
    %v122 = vsel %vm45, %v40, 0
    %v125 = vsel %vm45, %v41, 0
    %v128 = vsel %vm45, %v42, 0
    %v131 = vsel %vm45, %v43, 0
    %v134 = vsel %vm45, %v44, 0
    %136 = vmatprep.subr.mxu0 0.0
    %137 = vmatpush1.xpose.msra.mxu0 %v65
    %138 = vmatprep.subr.mxu0 0.0
    %139 = vmatpush1.xpose.msra.mxu0 %v68
    %140 = vmatprep.subr.mxu0 0.0
    %141 = vmatpush1.xpose.msra.mxu0 %v71
    %142 = vmatprep.subr.mxu0 0.0
    %143 = vmatpush1.xpose.msra.mxu0 %v74
    %144 = vmatprep.subr.mxu0 0.0
    %145 = vmatpush1.xpose.msra.mxu0 %v77
    %146 = vmatprep.subr.mxu0 0.0
    %147 = vmatpush1.xpose.msra.mxu0 %v80
    %148 = vmatprep.subr.mxu0 0.0
    %149 = vmatpush1.xpose.msra.mxu0 %v83
    %150 = vmatprep.subr.mxu0 0.0
    %151 = vmatpush1.xpose.msra.mxu0 %v86
    %152 = vmatprep.subr.mxu0 0.0
    %153 = vmatpush1.xpose.msra.mxu0 %v89
    %154 = vmatprep.subr.mxu0 0.0
    %155 = vmatpush1.xpose.msra.mxu0 %v92
    %156 = vmatprep.subr.mxu0 0.0
    %157 = vmatpush1.xpose.msra.mxu0 %v95
    %158 = vmatprep.subr.mxu0 0.0
    %159 = vmatpush1.xpose.msra.mxu0 %v98
    %160 = vmatprep.subr.mxu0 0.0
    %161 = vmatpush1.xpose.msra.mxu0 %v101
    %162 = vmatprep.subr.mxu0 0.0
    %163 = vmatpush1.xpose.msra.mxu0 %v104
    %164 = vmatprep.subr.mxu0 0.0
    %165 = vmatpush1.xpose.msra.mxu0 %v107
    %166 = vmatprep.subr.mxu0 0.0
    %167 = vmatpush1.xpose.msra.mxu0 %v110
    %168 = vmatprep.subr.mxu0 0.0
    %169 = vmatpush1.xpose.msra.mxu0 %v113
    %170 = vmatprep.subr.mxu0 0.0
    %171 = vmatpush1.xpose.msra.mxu0 %v116
    %172 = vmatprep.subr.mxu0 0.0
    %173 = vmatpush1.xpose.msra.mxu0 %v119
    %174 = vmatprep.subr.mxu0 0.0
    %175 = vmatpush1.xpose.msra.mxu0 %v122
    %176 = vmatprep.subr.mxu0 0.0
    %177 = vmatpush1.xpose.msra.mxu0 %v125
    %178 = vmatprep.subr.mxu0 0.0
    %179 = vmatpush1.xpose.msra.mxu0 %v128
    %180 = vmatprep.subr.mxu0 0.0
    %181 = vmatpush1.xpose.msra.mxu0 %v131
    %182 = vmatprep.subr.mxu0 0.0
    %183 = vmatpush1.xpose.msra.mxu0 %v134
    %184 = vmatprep.subr.mxu0 0.0
    %185 = vmatpush1.xpose.msra.mxu0 0.0
    %186 = vmatprep.subr.mxu0 0.0
    %187 = vmatpush1.xpose.msra.mxu0 0.0
    %188 = vmatprep.subr.mxu0 0.0
    %189 = vmatpush1.xpose.msra.mxu0 0.0
    %190 = vmatprep.subr.mxu0 0.0
    %191 = vmatpush1.xpose.msra.mxu0 0.0
    %192 = vmatprep.subr.mxu0 0.0
    %193 = vmatpush1.xpose.msra.mxu0 0.0
    %194 = vmatprep.subr.mxu0 0.0
    %195 = vmatpush1.xpose.msra.mxu0 0.0
    %196 = vmatprep.subr.mxu0 0.0
    %197 = vmatpush1.xpose.msra.mxu0 0.0
    %198 = vmatprep.subr.mxu0 0.0
    %199 = vmatpush1.xpose.msra.mxu0 0.0
    %200 = vmatprep.mubr.f32.mxu0 0.0
    %201 = vmatmul.mubr.f32.gmra.mrb[0].mxu0 %v47
    %v202 = vpop.f32.mrb[0].mxu0
    %v203 = vadd.f32 0.0, %v202
    %v204 = vpop.f32.mrb[0].mxu0
    %205 = vmatprep.mubr.f32.mxu0 0.0
    %206 = vmatmul.mubr.f32.gmra.mrb[0].mxu0 %v50
    %v207 = vpop.f32.mrb[0].mxu0
    %v208 = vadd.f32 0.0, %v207
    %v209 = vpop.f32.mrb[0].mxu0
    %210 = vmatprep.mubr.f32.mxu0 0.0
    %211 = vmatmul.mubr.f32.gmra.mrb[0].mxu0 %v53
    %v212 = vpop.f32.mrb[0].mxu0
    %v213 = vadd.f32 0.0, %v212
    %v214 = vpop.f32.mrb[0].mxu0
    %215 = vmatprep.mubr.f32.mxu0 0.0
    %216 = vmatmul.mubr.f32.gmra.mrb[0].mxu0 %v56
    %v217 = vpop.f32.mrb[0].mxu0
    %v218 = vadd.f32 0.0, %v217
    %v219 = vpop.f32.mrb[0].mxu0
    %220 = vmatprep.mubr.f32.mxu0 0.0
    %221 = vmatmul.mubr.f32.gmra.mrb[0].mxu0 %v59
    %v222 = vpop.f32.mrb[0].mxu0
    %v223 = vpop.f32.mrb[0].mxu0
    %v224 = vadd.f32 0.0, %v223
    %225 = vmatprep.mubr.f32.mxu0 0.0
    %226 = vmatmul.mubr.f32.gmra.mrb[0].mxu0 %v62
    %v227 = vpop.f32.mrb[0].mxu0
    %v228 = vpop.f32.mrb[0].mxu0
    %v229 = vadd.f32 0.0, %v228
    %230 = vdwg.mxu0
    %v231 = vld [vmem:[%s2] sm:$0x7]
    %v232 = vlaneseq
    %v233 = vshrl.u32 %v232, 7
    %v234 = vsub.s32 0, %v233
    %v235 = vrot.slane %v231, %v234
    %v236 = vadd.f32 %v203, %v235
    %v237 = vadd.f32 %v208, %v235
    %v238 = vlaneseq
    %v239 = vshrl.u32 %v238, 7
    %v240 = vsub.s32 1, %v239
    %v241 = vrot.slane %v231, %v240
    %243 = vrot.lane.b32.xlu0 %v241, 64
    %v244 = vpop.permute.xlu0 %243
    %v246 = vadd.f32 %v213, %v244
    %v247 = vadd.f32 %v218, %v244
    %v248 = vlaneseq
    %v249 = vshrl.u32 %v248, 7
    %v250 = vsub.s32 2, %v249
    %v251 = vrot.slane %v231, %v250
    %v252 = vadd.f32 %v224, %v251
    %v253 = vadd.f32 %v229, %v251
    %256 = vrot.lane.b32.xlu0 %v236, 120
    %v257 = vpop.permute.xlu0 %256
    %258 = vrot.lane.b32.xlu0 %v237, 120
    %v259 = vpop.permute.xlu0 %258
    %262 = vrot.lane.b32.xlu0 %v236, 112
    %v263 = vpop.permute.xlu0 %262
    %264 = vrot.lane.b32.xlu0 %v237, 112
    %v265 = vpop.permute.xlu0 %264
    %268 = vrot.lane.b32.xlu0 %v236, 104
    %v269 = vpop.permute.xlu0 %268
    %270 = vrot.lane.b32.xlu0 %v237, 104
    %v271 = vpop.permute.xlu0 %270
    %274 = vrot.lane.b32.xlu0 %v236, 96
    %v275 = vpop.permute.xlu0 %274
    %276 = vrot.lane.b32.xlu0 %v237, 96
    %v277 = vpop.permute.xlu0 %276
    %280 = vrot.lane.b32.xlu0 %v236, 88
    %v281 = vpop.permute.xlu0 %280
    %282 = vrot.lane.b32.xlu0 %v237, 88
    %v283 = vpop.permute.xlu0 %282
    %286 = vrot.lane.b32.xlu0 %v236, 80
    %v287 = vpop.permute.xlu0 %286
    %288 = vrot.lane.b32.xlu0 %v237, 80
    %v289 = vpop.permute.xlu0 %288
    %292 = vrot.lane.b32.xlu0 %v236, 72
    %v293 = vpop.permute.xlu0 %292
    %294 = vrot.lane.b32.xlu0 %v237, 72
    %v295 = vpop.permute.xlu0 %294
    %v298 = vcombine.low %v236, %v263
    %v299 = vcombine.high %v236, %v263
    %v301 = vunpack.c.l.s4 1983009808
    %v302 = vunpack.c.0.s8 %v301
    %v303 = vlaneseq
    %v304 = vshrl.u32 %v303, 7
    %v305 = vsub.s32 %v302, %v304
    %v306 = vrot.slane %v298, %v305
    %v308 = vunpack.c.l.s4 1983009808
    %v309 = vunpack.c.0.s8 %v308
    %v310 = vlaneseq
    %v311 = vshrl.u32 %v310, 7
    %v312 = vsub.s32 %v309, %v311
    %v313 = vrot.slane %v299, %v312
    %v314 = vcombine.low %v257, %v269
    %v315 = vcombine.high %v257, %v269
    %v317 = vunpack.c.l.s4 1983009808
    %v318 = vunpack.c.0.s8 %v317
    %v319 = vlaneseq
    %v320 = vshrl.u32 %v319, 7
    %v321 = vsub.s32 %v318, %v320
    %v322 = vrot.slane %v314, %v321
    %v324 = vunpack.c.l.s4 1983009808
    %v325 = vunpack.c.0.s8 %v324
    %v326 = vlaneseq
    %v327 = vshrl.u32 %v326, 7
    %v328 = vsub.s32 %v325, %v327
    %v329 = vrot.slane %v315, %v328
    %v330 = vcombine.low %v275, %v287
    %v331 = vcombine.high %v275, %v287
    %v333 = vunpack.c.l.s4 1983009808
    %v334 = vunpack.c.0.s8 %v333
    %v335 = vlaneseq
    %v336 = vshrl.u32 %v335, 7
    %v337 = vsub.s32 %v334, %v336
    %v338 = vrot.slane %v330, %v337
    %v340 = vunpack.c.l.s4 1983009808
    %v341 = vunpack.c.0.s8 %v340
    %v342 = vlaneseq
    %v343 = vshrl.u32 %v342, 7
    %v344 = vsub.s32 %v341, %v343
    %v345 = vrot.slane %v331, %v344
    %v346 = vcombine.low %v281, %v293
    %v347 = vcombine.high %v281, %v293
    %v349 = vunpack.c.l.s4 1983009808
    %v350 = vunpack.c.0.s8 %v349
    %v351 = vlaneseq
    %v352 = vshrl.u32 %v351, 7
    %v353 = vsub.s32 %v350, %v352
    %v354 = vrot.slane %v346, %v353
    %v356 = vunpack.c.l.s4 1983009808
    %v357 = vunpack.c.0.s8 %v356
    %v358 = vlaneseq
    %v359 = vshrl.u32 %v358, 7
    %v360 = vsub.s32 %v357, %v359
    %v361 = vrot.slane %v347, %v360
    %v362 = vcombine.low %v306, %v322
    %v363 = vcombine.high %v306, %v322
    %v365 = vunpack.c.l.s4 1934713408
    %v366 = vunpack.c.0.s8 %v365
    %v367 = vlaneseq
    %v368 = vshrl.u32 %v367, 7
    %v369 = vsub.s32 %v366, %v368
    %v370 = vrot.slane %v362, %v369
    %v372 = vunpack.c.l.s4 1934713408
    %v373 = vunpack.c.0.s8 %v372
    %v374 = vlaneseq
    %v375 = vshrl.u32 %v374, 7
    %v376 = vsub.s32 %v373, %v375
    %v377 = vrot.slane %v363, %v376
    %v378 = vcombine.low %v313, %v329
    %v379 = vcombine.high %v313, %v329
    %v381 = vunpack.c.l.s4 1934713408
    %v382 = vunpack.c.0.s8 %v381
    %v383 = vlaneseq
    %v384 = vshrl.u32 %v383, 7
    %v385 = vsub.s32 %v382, %v384
    %v386 = vrot.slane %v378, %v385
    %v388 = vunpack.c.l.s4 1934713408
    %v389 = vunpack.c.0.s8 %v388
    %v390 = vlaneseq
    %v391 = vshrl.u32 %v390, 7
    %v392 = vsub.s32 %v389, %v391
    %v393 = vrot.slane %v379, %v392
    %v394 = vcombine.low %v338, %v354
    %v395 = vcombine.high %v338, %v354
    %v397 = vunpack.c.l.s4 1934713408
    %v398 = vunpack.c.0.s8 %v397
    %v399 = vlaneseq
    %v400 = vshrl.u32 %v399, 7
    %v401 = vsub.s32 %v398, %v400
    %v402 = vrot.slane %v394, %v401
    %v404 = vunpack.c.l.s4 1934713408
    %v405 = vunpack.c.0.s8 %v404
    %v406 = vlaneseq
    %v407 = vshrl.u32 %v406, 7
    %v408 = vsub.s32 %v405, %v407
    %v409 = vrot.slane %v395, %v408
    %v410 = vcombine.low %v345, %v361
    %v411 = vcombine.high %v345, %v361
    %v413 = vunpack.c.l.s4 1934713408
    %v414 = vunpack.c.0.s8 %v413
    %v415 = vlaneseq
    %v416 = vshrl.u32 %v415, 7
    %v417 = vsub.s32 %v414, %v416
    %v418 = vrot.slane %v410, %v417
    %v420 = vunpack.c.l.s4 1934713408
    %v421 = vunpack.c.0.s8 %v420
    %v422 = vlaneseq
    %v423 = vshrl.u32 %v422, 7
    %v424 = vsub.s32 %v421, %v423
    %v425 = vrot.slane %v411, %v424
    %v426 = vcombine.low %v370, %v402
    %v427 = vcombine.high %v370, %v402
    %v428 = vcombine.low %v377, %v409
    %v429 = vcombine.high %v377, %v409
    %v430 = vcombine.low %v386, %v418
    %v431 = vcombine.high %v386, %v418
    %v432 = vcombine.low %v393, %v425
    %v433 = vcombine.high %v393, %v425
    %v434 = vcombine.low %v237, %v265
    %v435 = vcombine.high %v237, %v265
    %v437 = vunpack.c.l.s4 1983009808
    %v438 = vunpack.c.0.s8 %v437
    %v439 = vlaneseq
    %v440 = vshrl.u32 %v439, 7
    %v441 = vsub.s32 %v438, %v440
    %v442 = vrot.slane %v434, %v441
    %v444 = vunpack.c.l.s4 1983009808
    %v445 = vunpack.c.0.s8 %v444
    %v446 = vlaneseq
    %v447 = vshrl.u32 %v446, 7
    %v448 = vsub.s32 %v445, %v447
    %v449 = vrot.slane %v435, %v448
    %v450 = vcombine.low %v259, %v271
    %v451 = vcombine.high %v259, %v271
    %v453 = vunpack.c.l.s4 1983009808
    %v454 = vunpack.c.0.s8 %v453
    %v455 = vlaneseq
    %v456 = vshrl.u32 %v455, 7
    %v457 = vsub.s32 %v454, %v456
    %v458 = vrot.slane %v450, %v457
    %v460 = vunpack.c.l.s4 1983009808
    %v461 = vunpack.c.0.s8 %v460
    %v462 = vlaneseq
    %v463 = vshrl.u32 %v462, 7
    %v464 = vsub.s32 %v461, %v463
    %v465 = vrot.slane %v451, %v464
    %v466 = vcombine.low %v277, %v289
    %v467 = vcombine.high %v277, %v289
    %v469 = vunpack.c.l.s4 1983009808
    %v470 = vunpack.c.0.s8 %v469
    %v471 = vlaneseq
    %v472 = vshrl.u32 %v471, 7
    %v473 = vsub.s32 %v470, %v472
    %v474 = vrot.slane %v466, %v473
    %v476 = vunpack.c.l.s4 1983009808
    %v477 = vunpack.c.0.s8 %v476
    %v478 = vlaneseq
    %v479 = vshrl.u32 %v478, 7
    %v480 = vsub.s32 %v477, %v479
    %v481 = vrot.slane %v467, %v480
    %v482 = vcombine.low %v283, %v295
    %v483 = vcombine.high %v283, %v295
    %v485 = vunpack.c.l.s4 1983009808
    %v486 = vunpack.c.0.s8 %v485
    %v487 = vlaneseq
    %v488 = vshrl.u32 %v487, 7
    %v489 = vsub.s32 %v486, %v488
    %v490 = vrot.slane %v482, %v489
    %v492 = vunpack.c.l.s4 1983009808
    %v493 = vunpack.c.0.s8 %v492
    %v494 = vlaneseq
    %v495 = vshrl.u32 %v494, 7
    %v496 = vsub.s32 %v493, %v495
    %v497 = vrot.slane %v483, %v496
    %v498 = vcombine.low %v442, %v458
    %v499 = vcombine.high %v442, %v458
    %v501 = vunpack.c.l.s4 1934713408
    %v502 = vunpack.c.0.s8 %v501
    %v503 = vlaneseq
    %v504 = vshrl.u32 %v503, 7
    %v505 = vsub.s32 %v502, %v504
    %v506 = vrot.slane %v498, %v505
    %v508 = vunpack.c.l.s4 1934713408
    %v509 = vunpack.c.0.s8 %v508
    %v510 = vlaneseq
    %v511 = vshrl.u32 %v510, 7
    %v512 = vsub.s32 %v509, %v511
    %v513 = vrot.slane %v499, %v512
    %v514 = vcombine.low %v449, %v465
    %v515 = vcombine.high %v449, %v465
    %v517 = vunpack.c.l.s4 1934713408
    %v518 = vunpack.c.0.s8 %v517
    %v519 = vlaneseq
    %v520 = vshrl.u32 %v519, 7
    %v521 = vsub.s32 %v518, %v520
    %v522 = vrot.slane %v514, %v521
    %v524 = vunpack.c.l.s4 1934713408
    %v525 = vunpack.c.0.s8 %v524
    %v526 = vlaneseq
    %v527 = vshrl.u32 %v526, 7
    %v528 = vsub.s32 %v525, %v527
    %v529 = vrot.slane %v515, %v528
    %v530 = vcombine.low %v474, %v490
    %v531 = vcombine.high %v474, %v490
    %v533 = vunpack.c.l.s4 1934713408
    %v534 = vunpack.c.0.s8 %v533
    %v535 = vlaneseq
    %v536 = vshrl.u32 %v535, 7
    %v537 = vsub.s32 %v534, %v536
    %v538 = vrot.slane %v530, %v537
    %v540 = vunpack.c.l.s4 1934713408
    %v541 = vunpack.c.0.s8 %v540
    %v542 = vlaneseq
    %v543 = vshrl.u32 %v542, 7
    %v544 = vsub.s32 %v541, %v543
    %v545 = vrot.slane %v531, %v544
    %v546 = vcombine.low %v481, %v497
    %v547 = vcombine.high %v481, %v497
    %v549 = vunpack.c.l.s4 1934713408
    %v550 = vunpack.c.0.s8 %v549
    %v551 = vlaneseq
    %v552 = vshrl.u32 %v551, 7
    %v553 = vsub.s32 %v550, %v552
    %v554 = vrot.slane %v546, %v553
    %v556 = vunpack.c.l.s4 1934713408
    %v557 = vunpack.c.0.s8 %v556
    %v558 = vlaneseq
    %v559 = vshrl.u32 %v558, 7
    %v560 = vsub.s32 %v557, %v559
    %v561 = vrot.slane %v547, %v560
    %v562 = vcombine.low %v506, %v538
    %v563 = vcombine.high %v506, %v538
    %v564 = vcombine.low %v513, %v545
    %v565 = vcombine.high %v513, %v545
    %v566 = vcombine.low %v522, %v554
    %v567 = vcombine.high %v522, %v554
    %v568 = vcombine.low %v529, %v561
    %v569 = vcombine.high %v529, %v561
    %572 = vrot.lane.b32.xlu0 %v246, 120
    %v573 = vpop.permute.xlu0 %572
    %574 = vrot.lane.b32.xlu0 %v247, 120
    %v575 = vpop.permute.xlu0 %574
    %576 = vrot.lane.b32.xlu0 %v246, 112
    %v577 = vpop.permute.xlu0 %576
    %578 = vrot.lane.b32.xlu0 %v247, 112
    %v579 = vpop.permute.xlu0 %578
    %580 = vrot.lane.b32.xlu0 %v246, 104
    %v581 = vpop.permute.xlu0 %580
    %582 = vrot.lane.b32.xlu0 %v247, 104
    %v583 = vpop.permute.xlu0 %582
    %584 = vrot.lane.b32.xlu0 %v246, 96
    %v585 = vpop.permute.xlu0 %584
    %586 = vrot.lane.b32.xlu0 %v247, 96
    %v587 = vpop.permute.xlu0 %586
    %588 = vrot.lane.b32.xlu0 %v246, 88
    %v589 = vpop.permute.xlu0 %588
    %590 = vrot.lane.b32.xlu0 %v247, 88
    %v591 = vpop.permute.xlu0 %590
    %592 = vrot.lane.b32.xlu0 %v246, 80
    %v593 = vpop.permute.xlu0 %592
    %594 = vrot.lane.b32.xlu0 %v247, 80
    %v595 = vpop.permute.xlu0 %594
    %596 = vrot.lane.b32.xlu0 %v246, 72
    %v597 = vpop.permute.xlu0 %596
    %598 = vrot.lane.b32.xlu0 %v247, 72
    %v599 = vpop.permute.xlu0 %598
    %600 = vrot.lane.b32.xlu0 %v246, 64
    %v601 = vpop.permute.xlu0 %600
    %602 = vrot.lane.b32.xlu0 %v247, 64
    %v603 = vpop.permute.xlu0 %602
    %604 = vrot.lane.b32.xlu0 %v573, 64
    %v605 = vpop.permute.xlu0 %604
    %606 = vrot.lane.b32.xlu0 %v575, 64
    %v607 = vpop.permute.xlu0 %606
    %608 = vrot.lane.b32.xlu0 %v577, 64
    %v609 = vpop.permute.xlu0 %608
    %610 = vrot.lane.b32.xlu0 %v579, 64
    %v611 = vpop.permute.xlu0 %610
    %612 = vrot.lane.b32.xlu0 %v581, 64
    %v613 = vpop.permute.xlu0 %612
    %614 = vrot.lane.b32.xlu0 %v583, 64
    %v615 = vpop.permute.xlu0 %614
    %616 = vrot.lane.b32.xlu0 %v585, 64
    %v617 = vpop.permute.xlu0 %616
    %618 = vrot.lane.b32.xlu0 %v587, 64
    %v619 = vpop.permute.xlu0 %618
    %620 = vrot.lane.b32.xlu0 %v589, 64
    %v621 = vpop.permute.xlu0 %620
    %622 = vrot.lane.b32.xlu0 %v591, 64
    %v623 = vpop.permute.xlu0 %622
    %624 = vrot.lane.b32.xlu0 %v593, 64
    %v625 = vpop.permute.xlu0 %624
    %626 = vrot.lane.b32.xlu0 %v595, 64
    %v627 = vpop.permute.xlu0 %626
    %628 = vrot.lane.b32.xlu0 %v597, 64
    %v629 = vpop.permute.xlu0 %628
    %630 = vrot.lane.b32.xlu0 %v599, 64
    %v631 = vpop.permute.xlu0 %630
    %v648 = vcombine.low %v601, %v609
    %v649 = vcombine.high %v601, %v609
    %v651 = vunpack.c.l.s4 1983009808
    %v652 = vunpack.c.0.s8 %v651
    %v653 = vlaneseq
    %v654 = vshrl.u32 %v653, 7
    %v655 = vsub.s32 %v652, %v654
    %v656 = vrot.slane %v648, %v655
    %v658 = vunpack.c.l.s4 1983009808
    %v659 = vunpack.c.0.s8 %v658
    %v660 = vlaneseq
    %v661 = vshrl.u32 %v660, 7
    %v662 = vsub.s32 %v659, %v661
    %v663 = vrot.slane %v649, %v662
    %v664 = vcombine.low %v605, %v613
    %v665 = vcombine.high %v605, %v613
    %v667 = vunpack.c.l.s4 1983009808
    %v668 = vunpack.c.0.s8 %v667
    %v669 = vlaneseq
    %v670 = vshrl.u32 %v669, 7
    %v671 = vsub.s32 %v668, %v670
    %v672 = vrot.slane %v664, %v671
    %v674 = vunpack.c.l.s4 1983009808
    %v675 = vunpack.c.0.s8 %v674
    %v676 = vlaneseq
    %v677 = vshrl.u32 %v676, 7
    %v678 = vsub.s32 %v675, %v677
    %v679 = vrot.slane %v665, %v678
    %v680 = vcombine.low %v617, %v625
    %v681 = vcombine.high %v617, %v625
    %v683 = vunpack.c.l.s4 1983009808
    %v684 = vunpack.c.0.s8 %v683
    %v685 = vlaneseq
    %v686 = vshrl.u32 %v685, 7
    %v687 = vsub.s32 %v684, %v686
    %v688 = vrot.slane %v680, %v687
    %v690 = vunpack.c.l.s4 1983009808
    %v691 = vunpack.c.0.s8 %v690
    %v692 = vlaneseq
    %v693 = vshrl.u32 %v692, 7
    %v694 = vsub.s32 %v691, %v693
    %v695 = vrot.slane %v681, %v694
    %v696 = vcombine.low %v621, %v629
    %v697 = vcombine.high %v621, %v629
    %v699 = vunpack.c.l.s4 1983009808
    %v700 = vunpack.c.0.s8 %v699
    %v701 = vlaneseq
    %v702 = vshrl.u32 %v701, 7
    %v703 = vsub.s32 %v700, %v702
    %v704 = vrot.slane %v696, %v703
    %v706 = vunpack.c.l.s4 1983009808
    %v707 = vunpack.c.0.s8 %v706
    %v708 = vlaneseq
    %v709 = vshrl.u32 %v708, 7
    %v710 = vsub.s32 %v707, %v709
    %v711 = vrot.slane %v697, %v710
    %v712 = vcombine.low %v656, %v672
    %v713 = vcombine.high %v656, %v672
    %v715 = vunpack.c.l.s4 1934713408
    %v716 = vunpack.c.0.s8 %v715
    %v717 = vlaneseq
    %v718 = vshrl.u32 %v717, 7
    %v719 = vsub.s32 %v716, %v718
    %v720 = vrot.slane %v712, %v719
    %v722 = vunpack.c.l.s4 1934713408
    %v723 = vunpack.c.0.s8 %v722
    %v724 = vlaneseq
    %v725 = vshrl.u32 %v724, 7
    %v726 = vsub.s32 %v723, %v725
    %v727 = vrot.slane %v713, %v726
    %v728 = vcombine.low %v663, %v679
    %v729 = vcombine.high %v663, %v679
    %v731 = vunpack.c.l.s4 1934713408
    %v732 = vunpack.c.0.s8 %v731
    %v733 = vlaneseq
    %v734 = vshrl.u32 %v733, 7
    %v735 = vsub.s32 %v732, %v734
    %v736 = vrot.slane %v728, %v735
    %v738 = vunpack.c.l.s4 1934713408
    %v739 = vunpack.c.0.s8 %v738
    %v740 = vlaneseq
    %v741 = vshrl.u32 %v740, 7
    %v742 = vsub.s32 %v739, %v741
    %v743 = vrot.slane %v729, %v742
    %v744 = vcombine.low %v688, %v704
    %v745 = vcombine.high %v688, %v704
    %v747 = vunpack.c.l.s4 1934713408
    %v748 = vunpack.c.0.s8 %v747
    %v749 = vlaneseq
    %v750 = vshrl.u32 %v749, 7
    %v751 = vsub.s32 %v748, %v750
    %v752 = vrot.slane %v744, %v751
    %v754 = vunpack.c.l.s4 1934713408
    %v755 = vunpack.c.0.s8 %v754
    %v756 = vlaneseq
    %v757 = vshrl.u32 %v756, 7
    %v758 = vsub.s32 %v755, %v757
    %v759 = vrot.slane %v745, %v758
    %v760 = vcombine.low %v695, %v711
    %v761 = vcombine.high %v695, %v711
    %v763 = vunpack.c.l.s4 1934713408
    %v764 = vunpack.c.0.s8 %v763
    %v765 = vlaneseq
    %v766 = vshrl.u32 %v765, 7
    %v767 = vsub.s32 %v764, %v766
    %v768 = vrot.slane %v760, %v767
    %v770 = vunpack.c.l.s4 1934713408
    %v771 = vunpack.c.0.s8 %v770
    %v772 = vlaneseq
    %v773 = vshrl.u32 %v772, 7
    %v774 = vsub.s32 %v771, %v773
    %v775 = vrot.slane %v761, %v774
    %v776 = vcombine.low %v720, %v752
    %v777 = vcombine.high %v720, %v752
    %v778 = vcombine.low %v727, %v759
    %v779 = vcombine.high %v727, %v759
    %v780 = vcombine.low %v736, %v768
    %v781 = vcombine.high %v736, %v768
    %v782 = vcombine.low %v743, %v775
    %v783 = vcombine.high %v743, %v775
    %v784 = vcombine.low %v603, %v611
    %v785 = vcombine.high %v603, %v611
    %v787 = vunpack.c.l.s4 1983009808
    %v788 = vunpack.c.0.s8 %v787
    %v789 = vlaneseq
    %v790 = vshrl.u32 %v789, 7
    %v791 = vsub.s32 %v788, %v790
    %v792 = vrot.slane %v784, %v791
    %v794 = vunpack.c.l.s4 1983009808
    %v795 = vunpack.c.0.s8 %v794
    %v796 = vlaneseq
    %v797 = vshrl.u32 %v796, 7
    %v798 = vsub.s32 %v795, %v797
    %v799 = vrot.slane %v785, %v798
    %v800 = vcombine.low %v607, %v615
    %v801 = vcombine.high %v607, %v615
    %v803 = vunpack.c.l.s4 1983009808
    %v804 = vunpack.c.0.s8 %v803
    %v805 = vlaneseq
    %v806 = vshrl.u32 %v805, 7
    %v807 = vsub.s32 %v804, %v806
    %v808 = vrot.slane %v800, %v807
    %v810 = vunpack.c.l.s4 1983009808
    %v811 = vunpack.c.0.s8 %v810
    %v812 = vlaneseq
    %v813 = vshrl.u32 %v812, 7
    %v814 = vsub.s32 %v811, %v813
    %v815 = vrot.slane %v801, %v814
    %v816 = vcombine.low %v619, %v627
    %v817 = vcombine.high %v619, %v627
    %v819 = vunpack.c.l.s4 1983009808
    %v820 = vunpack.c.0.s8 %v819
    %v821 = vlaneseq
    %v822 = vshrl.u32 %v821, 7
    %v823 = vsub.s32 %v820, %v822
    %v824 = vrot.slane %v816, %v823
    %v826 = vunpack.c.l.s4 1983009808
    %v827 = vunpack.c.0.s8 %v826
    %v828 = vlaneseq
    %v829 = vshrl.u32 %v828, 7
    %v830 = vsub.s32 %v827, %v829
    %v831 = vrot.slane %v817, %v830
    %v832 = vcombine.low %v623, %v631
    %v833 = vcombine.high %v623, %v631
    %v835 = vunpack.c.l.s4 1983009808
    %v836 = vunpack.c.0.s8 %v835
    %v837 = vlaneseq
    %v838 = vshrl.u32 %v837, 7
    %v839 = vsub.s32 %v836, %v838
    %v840 = vrot.slane %v832, %v839
    %v842 = vunpack.c.l.s4 1983009808
    %v843 = vunpack.c.0.s8 %v842
    %v844 = vlaneseq
    %v845 = vshrl.u32 %v844, 7
    %v846 = vsub.s32 %v843, %v845
    %v847 = vrot.slane %v833, %v846
    %v848 = vcombine.low %v792, %v808
    %v849 = vcombine.high %v792, %v808
    %v851 = vunpack.c.l.s4 1934713408
    %v852 = vunpack.c.0.s8 %v851
    %v853 = vlaneseq
    %v854 = vshrl.u32 %v853, 7
    %v855 = vsub.s32 %v852, %v854
    %v856 = vrot.slane %v848, %v855
    %v858 = vunpack.c.l.s4 1934713408
    %v859 = vunpack.c.0.s8 %v858
    %v860 = vlaneseq
    %v861 = vshrl.u32 %v860, 7
    %v862 = vsub.s32 %v859, %v861
    %v863 = vrot.slane %v849, %v862
    %v864 = vcombine.low %v799, %v815
    %v865 = vcombine.high %v799, %v815
    %v867 = vunpack.c.l.s4 1934713408
    %v868 = vunpack.c.0.s8 %v867
    %v869 = vlaneseq
    %v870 = vshrl.u32 %v869, 7
    %v871 = vsub.s32 %v868, %v870
    %v872 = vrot.slane %v864, %v871
    %v874 = vunpack.c.l.s4 1934713408
    %v875 = vunpack.c.0.s8 %v874
    %v876 = vlaneseq
    %v877 = vshrl.u32 %v876, 7
    %v878 = vsub.s32 %v875, %v877
    %v879 = vrot.slane %v865, %v878
    %v880 = vcombine.low %v824, %v840
    %v881 = vcombine.high %v824, %v840
    %v883 = vunpack.c.l.s4 1934713408
    %v884 = vunpack.c.0.s8 %v883
    %v885 = vlaneseq
    %v886 = vshrl.u32 %v885, 7
    %v887 = vsub.s32 %v884, %v886
    %v888 = vrot.slane %v880, %v887
    %v890 = vunpack.c.l.s4 1934713408
    %v891 = vunpack.c.0.s8 %v890
    %v892 = vlaneseq
    %v893 = vshrl.u32 %v892, 7
    %v894 = vsub.s32 %v891, %v893
    %v895 = vrot.slane %v881, %v894
    %v896 = vcombine.low %v831, %v847
    %v897 = vcombine.high %v831, %v847
    %v899 = vunpack.c.l.s4 1934713408
    %v900 = vunpack.c.0.s8 %v899
    %v901 = vlaneseq
    %v902 = vshrl.u32 %v901, 7
    %v903 = vsub.s32 %v900, %v902
    %v904 = vrot.slane %v896, %v903
    %v906 = vunpack.c.l.s4 1934713408
    %v907 = vunpack.c.0.s8 %v906
    %v908 = vlaneseq
    %v909 = vshrl.u32 %v908, 7
    %v910 = vsub.s32 %v907, %v909
    %v911 = vrot.slane %v897, %v910
    %v912 = vcombine.low %v856, %v888
    %v913 = vcombine.high %v856, %v888
    %v914 = vcombine.low %v863, %v895
    %v915 = vcombine.high %v863, %v895
    %v916 = vcombine.low %v872, %v904
    %v917 = vcombine.high %v872, %v904
    %v918 = vcombine.low %v879, %v911
    %v919 = vcombine.high %v879, %v911
    %922 = vrot.lane.b32.xlu0 %v252, 120
    %v923 = vpop.permute.xlu0 %922
    %924 = vrot.lane.b32.xlu0 %v253, 120
    %v925 = vpop.permute.xlu0 %924
    %928 = vrot.lane.b32.xlu0 %v252, 112
    %v929 = vpop.permute.xlu0 %928
    %930 = vrot.lane.b32.xlu0 %v253, 112
    %v931 = vpop.permute.xlu0 %930
    %934 = vrot.lane.b32.xlu0 %v252, 104
    %v935 = vpop.permute.xlu0 %934
    %936 = vrot.lane.b32.xlu0 %v253, 104
    %v937 = vpop.permute.xlu0 %936
    %940 = vrot.lane.b32.xlu0 %v252, 96
    %v941 = vpop.permute.xlu0 %940
    %942 = vrot.lane.b32.xlu0 %v253, 96
    %v943 = vpop.permute.xlu0 %942
    %946 = vrot.lane.b32.xlu0 %v252, 88
    %v947 = vpop.permute.xlu0 %946
    %948 = vrot.lane.b32.xlu0 %v253, 88
    %v949 = vpop.permute.xlu0 %948
    %952 = vrot.lane.b32.xlu0 %v252, 80
    %v953 = vpop.permute.xlu0 %952
    %954 = vrot.lane.b32.xlu0 %v253, 80
    %v955 = vpop.permute.xlu0 %954
    %958 = vrot.lane.b32.xlu0 %v252, 72
    %v959 = vpop.permute.xlu0 %958
    %960 = vrot.lane.b32.xlu0 %v253, 72
    %v961 = vpop.permute.xlu0 %960
    %v964 = vcombine.low %v252, %v929
    %v965 = vcombine.high %v252, %v929
    %v967 = vunpack.c.l.s4 1983009808
    %v968 = vunpack.c.0.s8 %v967
    %v969 = vlaneseq
    %v970 = vshrl.u32 %v969, 7
    %v971 = vsub.s32 %v968, %v970
    %v972 = vrot.slane %v964, %v971
    %v974 = vunpack.c.l.s4 1983009808
    %v975 = vunpack.c.0.s8 %v974
    %v976 = vlaneseq
    %v977 = vshrl.u32 %v976, 7
    %v978 = vsub.s32 %v975, %v977
    %v979 = vrot.slane %v965, %v978
    %v980 = vcombine.low %v923, %v935
    %v981 = vcombine.high %v923, %v935
    %v983 = vunpack.c.l.s4 1983009808
    %v984 = vunpack.c.0.s8 %v983
    %v985 = vlaneseq
    %v986 = vshrl.u32 %v985, 7
    %v987 = vsub.s32 %v984, %v986
    %v988 = vrot.slane %v980, %v987
    %v990 = vunpack.c.l.s4 1983009808
    %v991 = vunpack.c.0.s8 %v990
    %v992 = vlaneseq
    %v993 = vshrl.u32 %v992, 7
    %v994 = vsub.s32 %v991, %v993
    %v995 = vrot.slane %v981, %v994
    %v996 = vcombine.low %v941, %v953
    %v997 = vcombine.high %v941, %v953
    %v999 = vunpack.c.l.s4 1983009808
    %v1000 = vunpack.c.0.s8 %v999
    %v1001 = vlaneseq
    %v1002 = vshrl.u32 %v1001, 7
    %v1003 = vsub.s32 %v1000, %v1002
    %v1004 = vrot.slane %v996, %v1003
    %v1006 = vunpack.c.l.s4 1983009808
    %v1007 = vunpack.c.0.s8 %v1006
    %v1008 = vlaneseq
    %v1009 = vshrl.u32 %v1008, 7
    %v1010 = vsub.s32 %v1007, %v1009
    %v1011 = vrot.slane %v997, %v1010
    %v1012 = vcombine.low %v947, %v959
    %v1013 = vcombine.high %v947, %v959
    %v1015 = vunpack.c.l.s4 1983009808
    %v1016 = vunpack.c.0.s8 %v1015
    %v1017 = vlaneseq
    %v1018 = vshrl.u32 %v1017, 7
    %v1019 = vsub.s32 %v1016, %v1018
    %v1020 = vrot.slane %v1012, %v1019
    %v1022 = vunpack.c.l.s4 1983009808
    %v1023 = vunpack.c.0.s8 %v1022
    %v1024 = vlaneseq
    %v1025 = vshrl.u32 %v1024, 7
    %v1026 = vsub.s32 %v1023, %v1025
    %v1027 = vrot.slane %v1013, %v1026
    %v1028 = vcombine.low %v972, %v988
    %v1029 = vcombine.high %v972, %v988
    %v1031 = vunpack.c.l.s4 1934713408
    %v1032 = vunpack.c.0.s8 %v1031
    %v1033 = vlaneseq
    %v1034 = vshrl.u32 %v1033, 7
    %v1035 = vsub.s32 %v1032, %v1034
    %v1036 = vrot.slane %v1028, %v1035
    %v1038 = vunpack.c.l.s4 1934713408
    %v1039 = vunpack.c.0.s8 %v1038
    %v1040 = vlaneseq
    %v1041 = vshrl.u32 %v1040, 7
    %v1042 = vsub.s32 %v1039, %v1041
    %v1043 = vrot.slane %v1029, %v1042
    %v1044 = vcombine.low %v979, %v995
    %v1045 = vcombine.high %v979, %v995
    %v1047 = vunpack.c.l.s4 1934713408
    %v1048 = vunpack.c.0.s8 %v1047
    %v1049 = vlaneseq
    %v1050 = vshrl.u32 %v1049, 7
    %v1051 = vsub.s32 %v1048, %v1050
    %v1052 = vrot.slane %v1044, %v1051
    %v1054 = vunpack.c.l.s4 1934713408
    %v1055 = vunpack.c.0.s8 %v1054
    %v1056 = vlaneseq
    %v1057 = vshrl.u32 %v1056, 7
    %v1058 = vsub.s32 %v1055, %v1057
    %v1059 = vrot.slane %v1045, %v1058
    %v1060 = vcombine.low %v1004, %v1020
    %v1061 = vcombine.high %v1004, %v1020
    %v1063 = vunpack.c.l.s4 1934713408
    %v1064 = vunpack.c.0.s8 %v1063
    %v1065 = vlaneseq
    %v1066 = vshrl.u32 %v1065, 7
    %v1067 = vsub.s32 %v1064, %v1066
    %v1068 = vrot.slane %v1060, %v1067
    %v1070 = vunpack.c.l.s4 1934713408
    %v1071 = vunpack.c.0.s8 %v1070
    %v1072 = vlaneseq
    %v1073 = vshrl.u32 %v1072, 7
    %v1074 = vsub.s32 %v1071, %v1073
    %v1075 = vrot.slane %v1061, %v1074
    %v1076 = vcombine.low %v1011, %v1027
    %v1077 = vcombine.high %v1011, %v1027
    %v1079 = vunpack.c.l.s4 1934713408
    %v1080 = vunpack.c.0.s8 %v1079
    %v1081 = vlaneseq
    %v1082 = vshrl.u32 %v1081, 7
    %v1083 = vsub.s32 %v1080, %v1082
    %v1084 = vrot.slane %v1076, %v1083
    %v1086 = vunpack.c.l.s4 1934713408
    %v1087 = vunpack.c.0.s8 %v1086
    %v1088 = vlaneseq
    %v1089 = vshrl.u32 %v1088, 7
    %v1090 = vsub.s32 %v1087, %v1089
    %v1091 = vrot.slane %v1077, %v1090
    %v1092 = vcombine.low %v1036, %v1068
    %v1093 = vcombine.high %v1036, %v1068
    %v1094 = vcombine.low %v1043, %v1075
    %v1095 = vcombine.high %v1043, %v1075
    %v1096 = vcombine.low %v1052, %v1084
    %v1097 = vcombine.high %v1052, %v1084
    %v1098 = vcombine.low %v1059, %v1091
    %v1099 = vcombine.high %v1059, %v1091
    %v1100 = vcombine.low %v253, %v931
    %v1101 = vcombine.high %v253, %v931
    %v1103 = vunpack.c.l.s4 1983009808
    %v1104 = vunpack.c.0.s8 %v1103
    %v1105 = vlaneseq
    %v1106 = vshrl.u32 %v1105, 7
    %v1107 = vsub.s32 %v1104, %v1106
    %v1108 = vrot.slane %v1100, %v1107
    %v1110 = vunpack.c.l.s4 1983009808
    %v1111 = vunpack.c.0.s8 %v1110
    %v1112 = vlaneseq
    %v1113 = vshrl.u32 %v1112, 7
    %v1114 = vsub.s32 %v1111, %v1113
    %v1115 = vrot.slane %v1101, %v1114
    %v1116 = vcombine.low %v925, %v937
    %v1117 = vcombine.high %v925, %v937
    %v1119 = vunpack.c.l.s4 1983009808
    %v1120 = vunpack.c.0.s8 %v1119
    %v1121 = vlaneseq
    %v1122 = vshrl.u32 %v1121, 7
    %v1123 = vsub.s32 %v1120, %v1122
    %v1124 = vrot.slane %v1116, %v1123
    %v1126 = vunpack.c.l.s4 1983009808
    %v1127 = vunpack.c.0.s8 %v1126
    %v1128 = vlaneseq
    %v1129 = vshrl.u32 %v1128, 7
    %v1130 = vsub.s32 %v1127, %v1129
    %v1131 = vrot.slane %v1117, %v1130
    %v1132 = vcombine.low %v943, %v955
    %v1133 = vcombine.high %v943, %v955
    %v1135 = vunpack.c.l.s4 1983009808
    %v1136 = vunpack.c.0.s8 %v1135
    %v1137 = vlaneseq
    %v1138 = vshrl.u32 %v1137, 7
    %v1139 = vsub.s32 %v1136, %v1138
    %v1140 = vrot.slane %v1132, %v1139
    %v1142 = vunpack.c.l.s4 1983009808
    %v1143 = vunpack.c.0.s8 %v1142
    %v1144 = vlaneseq
    %v1145 = vshrl.u32 %v1144, 7
    %v1146 = vsub.s32 %v1143, %v1145
    %v1147 = vrot.slane %v1133, %v1146
    %v1148 = vcombine.low %v949, %v961
    %v1149 = vcombine.high %v949, %v961
    %v1151 = vunpack.c.l.s4 1983009808
    %v1152 = vunpack.c.0.s8 %v1151
    %v1153 = vlaneseq
    %v1154 = vshrl.u32 %v1153, 7
    %v1155 = vsub.s32 %v1152, %v1154
    %v1156 = vrot.slane %v1148, %v1155
    %v1158 = vunpack.c.l.s4 1983009808
    %v1159 = vunpack.c.0.s8 %v1158
    %v1160 = vlaneseq
    %v1161 = vshrl.u32 %v1160, 7
    %v1162 = vsub.s32 %v1159, %v1161
    %v1163 = vrot.slane %v1149, %v1162
    %v1164 = vcombine.low %v1108, %v1124
    %v1165 = vcombine.high %v1108, %v1124
    %v1167 = vunpack.c.l.s4 1934713408
    %v1168 = vunpack.c.0.s8 %v1167
    %v1169 = vlaneseq
    %v1170 = vshrl.u32 %v1169, 7
    %v1171 = vsub.s32 %v1168, %v1170
    %v1172 = vrot.slane %v1164, %v1171
    %v1174 = vunpack.c.l.s4 1934713408
    %v1175 = vunpack.c.0.s8 %v1174
    %v1176 = vlaneseq
    %v1177 = vshrl.u32 %v1176, 7
    %v1178 = vsub.s32 %v1175, %v1177
    %v1179 = vrot.slane %v1165, %v1178
    %v1180 = vcombine.low %v1115, %v1131
    %v1181 = vcombine.high %v1115, %v1131
    %v1183 = vunpack.c.l.s4 1934713408
    %v1184 = vunpack.c.0.s8 %v1183
    %v1185 = vlaneseq
    %v1186 = vshrl.u32 %v1185, 7
    %v1187 = vsub.s32 %v1184, %v1186
    %v1188 = vrot.slane %v1180, %v1187
    %v1190 = vunpack.c.l.s4 1934713408
    %v1191 = vunpack.c.0.s8 %v1190
    %v1192 = vlaneseq
    %v1193 = vshrl.u32 %v1192, 7
    %v1194 = vsub.s32 %v1191, %v1193
    %v1195 = vrot.slane %v1181, %v1194
    %v1196 = vcombine.low %v1140, %v1156
    %v1197 = vcombine.high %v1140, %v1156
    %v1199 = vunpack.c.l.s4 1934713408
    %v1200 = vunpack.c.0.s8 %v1199
    %v1201 = vlaneseq
    %v1202 = vshrl.u32 %v1201, 7
    %v1203 = vsub.s32 %v1200, %v1202
    %v1204 = vrot.slane %v1196, %v1203
    %v1206 = vunpack.c.l.s4 1934713408
    %v1207 = vunpack.c.0.s8 %v1206
    %v1208 = vlaneseq
    %v1209 = vshrl.u32 %v1208, 7
    %v1210 = vsub.s32 %v1207, %v1209
    %v1211 = vrot.slane %v1197, %v1210
    %v1212 = vcombine.low %v1147, %v1163
    %v1213 = vcombine.high %v1147, %v1163
    %v1215 = vunpack.c.l.s4 1934713408
    %v1216 = vunpack.c.0.s8 %v1215
    %v1217 = vlaneseq
    %v1218 = vshrl.u32 %v1217, 7
    %v1219 = vsub.s32 %v1216, %v1218
    %v1220 = vrot.slane %v1212, %v1219
    %v1222 = vunpack.c.l.s4 1934713408
    %v1223 = vunpack.c.0.s8 %v1222
    %v1224 = vlaneseq
    %v1225 = vshrl.u32 %v1224, 7
    %v1226 = vsub.s32 %v1223, %v1225
    %v1227 = vrot.slane %v1213, %v1226
    %v1228 = vcombine.low %v1172, %v1204
    %v1229 = vcombine.high %v1172, %v1204
    %v1230 = vcombine.low %v1179, %v1211
    %v1231 = vcombine.high %v1179, %v1211
    %v1232 = vcombine.low %v1188, %v1220
    %v1233 = vcombine.high %v1188, %v1220
    %v1234 = vcombine.low %v1195, %v1227
    %v1235 = vcombine.high %v1195, %v1227
    %vm1236 = vcmask 64512
    %v1238 = vsel %vm1236, %v426, 0
    %v1241 = vsel %vm1236, %v776, 0
    %1243 = vmatprep.subr.mxu0 0.0
    %1244 = vmatpush1.xpose.msra.mxu0 %v1241
    %1245 = vmatprep.subr.mxu0 0.0
    %1246 = vmatpush1.xpose.msra.mxu0 0.0
    %1247 = vmatprep.subr.mxu0 0.0
    %1248 = vmatpush1.xpose.msra.mxu0 0.0
    %1249 = vmatprep.subr.mxu0 0.0
    %1250 = vmatpush1.xpose.msra.mxu0 0.0
    %1251 = vmatprep.subr.mxu0 0.0
    %1252 = vmatpush1.xpose.msra.mxu0 0.0
    %1253 = vmatprep.subr.mxu0 0.0
    %1254 = vmatpush1.xpose.msra.mxu0 0.0
    %1255 = vmatprep.subr.mxu0 0.0
    %1256 = vmatpush1.xpose.msra.mxu0 0.0
    %1257 = vmatprep.subr.mxu0 0.0
    %1258 = vmatpush1.xpose.msra.mxu0 0.0
    %1259 = vmatprep.subr.mxu0 0.0
    %1260 = vmatpush1.xpose.msra.mxu0 0.0
    %1261 = vmatprep.subr.mxu0 0.0
    %1262 = vmatpush1.xpose.msra.mxu0 0.0
    %1263 = vmatprep.subr.mxu0 0.0
    %1264 = vmatpush1.xpose.msra.mxu0 0.0
    %1265 = vmatprep.subr.mxu0 0.0
    %1266 = vmatpush1.xpose.msra.mxu0 0.0
    %1267 = vmatprep.subr.mxu0 0.0
    %1268 = vmatpush1.xpose.msra.mxu0 0.0
    %1269 = vmatprep.subr.mxu0 0.0
    %1270 = vmatpush1.xpose.msra.mxu0 0.0
    %1271 = vmatprep.subr.mxu0 0.0
    %1272 = vmatpush1.xpose.msra.mxu0 0.0
    %1273 = vmatprep.subr.mxu0 0.0
    %1274 = vmatpush1.xpose.msra.mxu0 0.0
    %1275 = vmatprep.subr.mxu0 0.0
    %1276 = vmatpush1.xpose.msra.mxu0 0.0
    %1277 = vmatprep.subr.mxu0 0.0
    %1278 = vmatpush1.xpose.msra.mxu0 0.0
    %1279 = vmatprep.subr.mxu0 0.0
    %1280 = vmatpush1.xpose.msra.mxu0 0.0
    %1281 = vmatprep.subr.mxu0 0.0
    %1282 = vmatpush1.xpose.msra.mxu0 0.0
    %1283 = vmatprep.subr.mxu0 0.0
    %1284 = vmatpush1.xpose.msra.mxu0 0.0
    %1285 = vmatprep.subr.mxu0 0.0
    %1286 = vmatpush1.xpose.msra.mxu0 0.0
    %1287 = vmatprep.subr.mxu0 0.0
    %1288 = vmatpush1.xpose.msra.mxu0 0.0
    %1289 = vmatprep.subr.mxu0 0.0
    %1290 = vmatpush1.xpose.msra.mxu0 0.0
    %1291 = vmatprep.subr.mxu0 0.0
    %1292 = vmatpush1.xpose.msra.mxu0 0.0
    %1293 = vmatprep.subr.mxu0 0.0
    %1294 = vmatpush1.xpose.msra.mxu0 0.0
    %1295 = vmatprep.subr.mxu0 0.0
    %1296 = vmatpush1.xpose.msra.mxu0 0.0
    %1297 = vmatprep.subr.mxu0 0.0
    %1298 = vmatpush1.xpose.msra.mxu0 0.0
    %1299 = vmatprep.subr.mxu0 0.0
    %1300 = vmatpush1.xpose.msra.mxu0 0.0
    %1301 = vmatprep.subr.mxu0 0.0
    %1302 = vmatpush1.xpose.msra.mxu0 0.0
    %1303 = vmatprep.subr.mxu0 0.0
    %1304 = vmatpush1.xpose.msra.mxu0 0.0
    %1305 = vmatprep.subr.mxu0 0.0
    %1306 = vmatpush1.xpose.msra.mxu0 0.0
    %1307 = vmatprep.mubr.f32.mxu0 0.0
    %1308 = vmatmul.mubr.f32.gmra.mrb[0].mxu0 %v1238
    %v1309 = vpop.f32.mrb[0].mxu0
    %v1310 = vadd.f32 0.0, %v1309
    %v1311 = vpop.f32.mrb[0].mxu0
    %1312 = vdwg.mxu0
    %v1314 = vsel %vm1236, %v427, 0
    %v1317 = vsel %vm1236, %v777, 0
    %1319 = vmatprep.subr.mxu0 0.0
    %1320 = vmatpush1.xpose.msra.mxu0 %v1317
    %1321 = vmatprep.subr.mxu0 0.0
    %1322 = vmatpush1.xpose.msra.mxu0 0.0
    %1323 = vmatprep.subr.mxu0 0.0
    %1324 = vmatpush1.xpose.msra.mxu0 0.0
    %1325 = vmatprep.subr.mxu0 0.0
    %1326 = vmatpush1.xpose.msra.mxu0 0.0
    %1327 = vmatprep.subr.mxu0 0.0
    %1328 = vmatpush1.xpose.msra.mxu0 0.0
    %1329 = vmatprep.subr.mxu0 0.0
    %1330 = vmatpush1.xpose.msra.mxu0 0.0
    %1331 = vmatprep.subr.mxu0 0.0
    %1332 = vmatpush1.xpose.msra.mxu0 0.0
    %1333 = vmatprep.subr.mxu0 0.0
    %1334 = vmatpush1.xpose.msra.mxu0 0.0
    %1335 = vmatprep.subr.mxu0 0.0
    %1336 = vmatpush1.xpose.msra.mxu0 0.0
    %1337 = vmatprep.subr.mxu0 0.0
    %1338 = vmatpush1.xpose.msra.mxu0 0.0
    %1339 = vmatprep.subr.mxu0 0.0
    %1340 = vmatpush1.xpose.msra.mxu0 0.0
    %1341 = vmatprep.subr.mxu0 0.0
    %1342 = vmatpush1.xpose.msra.mxu0 0.0
    %1343 = vmatprep.subr.mxu0 0.0
    %1344 = vmatpush1.xpose.msra.mxu0 0.0
    %1345 = vmatprep.subr.mxu0 0.0
    %1346 = vmatpush1.xpose.msra.mxu0 0.0
    %1347 = vmatprep.subr.mxu0 0.0
    %1348 = vmatpush1.xpose.msra.mxu0 0.0
    %1349 = vmatprep.subr.mxu0 0.0
    %1350 = vmatpush1.xpose.msra.mxu0 0.0
    %1351 = vmatprep.subr.mxu0 0.0
    %1352 = vmatpush1.xpose.msra.mxu0 0.0
    %1353 = vmatprep.subr.mxu0 0.0
    %1354 = vmatpush1.xpose.msra.mxu0 0.0
    %1355 = vmatprep.subr.mxu0 0.0
    %1356 = vmatpush1.xpose.msra.mxu0 0.0
    %1357 = vmatprep.subr.mxu0 0.0
    %1358 = vmatpush1.xpose.msra.mxu0 0.0
    %1359 = vmatprep.subr.mxu0 0.0
    %1360 = vmatpush1.xpose.msra.mxu0 0.0
    %1361 = vmatprep.subr.mxu0 0.0
    %1362 = vmatpush1.xpose.msra.mxu0 0.0
    %1363 = vmatprep.subr.mxu0 0.0
    %1364 = vmatpush1.xpose.msra.mxu0 0.0
    %1365 = vmatprep.subr.mxu0 0.0
    %1366 = vmatpush1.xpose.msra.mxu0 0.0
    %1367 = vmatprep.subr.mxu0 0.0
    %1368 = vmatpush1.xpose.msra.mxu0 0.0
    %1369 = vmatprep.subr.mxu0 0.0
    %1370 = vmatpush1.xpose.msra.mxu0 0.0
    %1371 = vmatprep.subr.mxu0 0.0
    %1372 = vmatpush1.xpose.msra.mxu0 0.0
    %1373 = vmatprep.subr.mxu0 0.0
    %1374 = vmatpush1.xpose.msra.mxu0 0.0
    %1375 = vmatprep.subr.mxu0 0.0
    %1376 = vmatpush1.xpose.msra.mxu0 0.0
    %1377 = vmatprep.subr.mxu0 0.0
    %1378 = vmatpush1.xpose.msra.mxu0 0.0
    %1379 = vmatprep.subr.mxu0 0.0
    %1380 = vmatpush1.xpose.msra.mxu0 0.0
    %1381 = vmatprep.subr.mxu0 0.0
    %1382 = vmatpush1.xpose.msra.mxu0 0.0
    %1383 = vmatprep.mubr.f32.mxu0 0.0
    %1384 = vmatmul.mubr.f32.gmra.mrb[0].mxu0 %v1314
    %v1385 = vpop.f32.mrb[0].mxu0
    %v1386 = vadd.f32 0.0, %v1385
    %v1387 = vpop.f32.mrb[0].mxu0
    %1388 = vdwg.mxu0
    %v1390 = vsel %vm1236, %v428, 0
    %v1393 = vsel %vm1236, %v778, 0
    %1395 = vmatprep.subr.mxu0 0.0
    %1396 = vmatpush1.xpose.msra.mxu0 %v1393
    %1397 = vmatprep.subr.mxu0 0.0
    %1398 = vmatpush1.xpose.msra.mxu0 0.0
    %1399 = vmatprep.subr.mxu0 0.0
    %1400 = vmatpush1.xpose.msra.mxu0 0.0
    %1401 = vmatprep.subr.mxu0 0.0
    %1402 = vmatpush1.xpose.msra.mxu0 0.0
    %1403 = vmatprep.subr.mxu0 0.0
    %1404 = vmatpush1.xpose.msra.mxu0 0.0
    %1405 = vmatprep.subr.mxu0 0.0
    %1406 = vmatpush1.xpose.msra.mxu0 0.0
    %1407 = vmatprep.subr.mxu0 0.0
    %1408 = vmatpush1.xpose.msra.mxu0 0.0
    %1409 = vmatprep.subr.mxu0 0.0
    %1410 = vmatpush1.xpose.msra.mxu0 0.0
    %1411 = vmatprep.subr.mxu0 0.0
    %1412 = vmatpush1.xpose.msra.mxu0 0.0
    %1413 = vmatprep.subr.mxu0 0.0
    %1414 = vmatpush1.xpose.msra.mxu0 0.0
    %1415 = vmatprep.subr.mxu0 0.0
    %1416 = vmatpush1.xpose.msra.mxu0 0.0
    %1417 = vmatprep.subr.mxu0 0.0
    %1418 = vmatpush1.xpose.msra.mxu0 0.0
    %1419 = vmatprep.subr.mxu0 0.0
    %1420 = vmatpush1.xpose.msra.mxu0 0.0
    %1421 = vmatprep.subr.mxu0 0.0
    %1422 = vmatpush1.xpose.msra.mxu0 0.0
    %1423 = vmatprep.subr.mxu0 0.0
    %1424 = vmatpush1.xpose.msra.mxu0 0.0
    %1425 = vmatprep.subr.mxu0 0.0
    %1426 = vmatpush1.xpose.msra.mxu0 0.0
    %1427 = vmatprep.subr.mxu0 0.0
    %1428 = vmatpush1.xpose.msra.mxu0 0.0
    %1429 = vmatprep.subr.mxu0 0.0
    %1430 = vmatpush1.xpose.msra.mxu0 0.0
    %1431 = vmatprep.subr.mxu0 0.0
    %1432 = vmatpush1.xpose.msra.mxu0 0.0
    %1433 = vmatprep.subr.mxu0 0.0
    %1434 = vmatpush1.xpose.msra.mxu0 0.0
    %1435 = vmatprep.subr.mxu0 0.0
    %1436 = vmatpush1.xpose.msra.mxu0 0.0
    %1437 = vmatprep.subr.mxu0 0.0
    %1438 = vmatpush1.xpose.msra.mxu0 0.0
    %1439 = vmatprep.subr.mxu0 0.0
    %1440 = vmatpush1.xpose.msra.mxu0 0.0
    %1441 = vmatprep.subr.mxu0 0.0
    %1442 = vmatpush1.xpose.msra.mxu0 0.0
    %1443 = vmatprep.subr.mxu0 0.0
    %1444 = vmatpush1.xpose.msra.mxu0 0.0
    %1445 = vmatprep.subr.mxu0 0.0
    %1446 = vmatpush1.xpose.msra.mxu0 0.0
    %1447 = vmatprep.subr.mxu0 0.0
    %1448 = vmatpush1.xpose.msra.mxu0 0.0
    %1449 = vmatprep.subr.mxu0 0.0
    %1450 = vmatpush1.xpose.msra.mxu0 0.0
    %1451 = vmatprep.subr.mxu0 0.0
    %1452 = vmatpush1.xpose.msra.mxu0 0.0
    %1453 = vmatprep.subr.mxu0 0.0
    %1454 = vmatpush1.xpose.msra.mxu0 0.0
    %1455 = vmatprep.subr.mxu0 0.0
    %1456 = vmatpush1.xpose.msra.mxu0 0.0
    %1457 = vmatprep.subr.mxu0 0.0
    %1458 = vmatpush1.xpose.msra.mxu0 0.0
    %1459 = vmatprep.mubr.f32.mxu0 0.0
    %1460 = vmatmul.mubr.f32.gmra.mrb[0].mxu0 %v1390
    %v1461 = vpop.f32.mrb[0].mxu0
    %v1462 = vadd.f32 0.0, %v1461
    %v1463 = vpop.f32.mrb[0].mxu0
    %1464 = vdwg.mxu0
    %v1466 = vsel %vm1236, %v429, 0
    %v1469 = vsel %vm1236, %v779, 0
    %1471 = vmatprep.subr.mxu0 0.0
    %1472 = vmatpush1.xpose.msra.mxu0 %v1469
    %1473 = vmatprep.subr.mxu0 0.0
    %1474 = vmatpush1.xpose.msra.mxu0 0.0
    %1475 = vmatprep.subr.mxu0 0.0
    %1476 = vmatpush1.xpose.msra.mxu0 0.0
    %1477 = vmatprep.subr.mxu0 0.0
    %1478 = vmatpush1.xpose.msra.mxu0 0.0
    %1479 = vmatprep.subr.mxu0 0.0
    %1480 = vmatpush1.xpose.msra.mxu0 0.0
    %1481 = vmatprep.subr.mxu0 0.0
    %1482 = vmatpush1.xpose.msra.mxu0 0.0
    %1483 = vmatprep.subr.mxu0 0.0
    %1484 = vmatpush1.xpose.msra.mxu0 0.0
    %1485 = vmatprep.subr.mxu0 0.0
    %1486 = vmatpush1.xpose.msra.mxu0 0.0
    %1487 = vmatprep.subr.mxu0 0.0
    %1488 = vmatpush1.xpose.msra.mxu0 0.0
    %1489 = vmatprep.subr.mxu0 0.0
    %1490 = vmatpush1.xpose.msra.mxu0 0.0
    %1491 = vmatprep.subr.mxu0 0.0
    %1492 = vmatpush1.xpose.msra.mxu0 0.0
    %1493 = vmatprep.subr.mxu0 0.0
    %1494 = vmatpush1.xpose.msra.mxu0 0.0
    %1495 = vmatprep.subr.mxu0 0.0
    %1496 = vmatpush1.xpose.msra.mxu0 0.0
    %1497 = vmatprep.subr.mxu0 0.0
    %1498 = vmatpush1.xpose.msra.mxu0 0.0
    %1499 = vmatprep.subr.mxu0 0.0
    %1500 = vmatpush1.xpose.msra.mxu0 0.0
    %1501 = vmatprep.subr.mxu0 0.0
    %1502 = vmatpush1.xpose.msra.mxu0 0.0
    %1503 = vmatprep.subr.mxu0 0.0
    %1504 = vmatpush1.xpose.msra.mxu0 0.0
    %1505 = vmatprep.subr.mxu0 0.0
    %1506 = vmatpush1.xpose.msra.mxu0 0.0
    %1507 = vmatprep.subr.mxu0 0.0
    %1508 = vmatpush1.xpose.msra.mxu0 0.0
    %1509 = vmatprep.subr.mxu0 0.0
    %1510 = vmatpush1.xpose.msra.mxu0 0.0
    %1511 = vmatprep.subr.mxu0 0.0
    %1512 = vmatpush1.xpose.msra.mxu0 0.0
    %1513 = vmatprep.subr.mxu0 0.0
    %1514 = vmatpush1.xpose.msra.mxu0 0.0
    %1515 = vmatprep.subr.mxu0 0.0
    %1516 = vmatpush1.xpose.msra.mxu0 0.0
    %1517 = vmatprep.subr.mxu0 0.0
    %1518 = vmatpush1.xpose.msra.mxu0 0.0
    %1519 = vmatprep.subr.mxu0 0.0
    %1520 = vmatpush1.xpose.msra.mxu0 0.0
    %1521 = vmatprep.subr.mxu0 0.0
    %1522 = vmatpush1.xpose.msra.mxu0 0.0
    %1523 = vmatprep.subr.mxu0 0.0
    %1524 = vmatpush1.xpose.msra.mxu0 0.0
    %1525 = vmatprep.subr.mxu0 0.0
    %1526 = vmatpush1.xpose.msra.mxu0 0.0
    %1527 = vmatprep.subr.mxu0 0.0
    %1528 = vmatpush1.xpose.msra.mxu0 0.0
    %1529 = vmatprep.subr.mxu0 0.0
    %1530 = vmatpush1.xpose.msra.mxu0 0.0
    %1531 = vmatprep.subr.mxu0 0.0
    %1532 = vmatpush1.xpose.msra.mxu0 0.0
    %1533 = vmatprep.subr.mxu0 0.0
    %1534 = vmatpush1.xpose.msra.mxu0 0.0
    %1535 = vmatprep.mubr.f32.mxu0 0.0
    %1536 = vmatmul.mubr.f32.gmra.mrb[0].mxu0 %v1466
    %v1537 = vpop.f32.mrb[0].mxu0
    %v1538 = vadd.f32 0.0, %v1537
    %v1539 = vpop.f32.mrb[0].mxu0
    %1540 = vdwg.mxu0
    %v1542 = vsel %vm1236, %v430, 0
    %v1545 = vsel %vm1236, %v780, 0
    %1547 = vmatprep.subr.mxu0 0.0
    %1548 = vmatpush1.xpose.msra.mxu0 %v1545
    %1549 = vmatprep.subr.mxu0 0.0
    %1550 = vmatpush1.xpose.msra.mxu0 0.0
    %1551 = vmatprep.subr.mxu0 0.0
    %1552 = vmatpush1.xpose.msra.mxu0 0.0
    %1553 = vmatprep.subr.mxu0 0.0
    %1554 = vmatpush1.xpose.msra.mxu0 0.0
    %1555 = vmatprep.subr.mxu0 0.0
    %1556 = vmatpush1.xpose.msra.mxu0 0.0
    %1557 = vmatprep.subr.mxu0 0.0
    %1558 = vmatpush1.xpose.msra.mxu0 0.0
    %1559 = vmatprep.subr.mxu0 0.0
    %1560 = vmatpush1.xpose.msra.mxu0 0.0
    %1561 = vmatprep.subr.mxu0 0.0
    %1562 = vmatpush1.xpose.msra.mxu0 0.0
    %1563 = vmatprep.subr.mxu0 0.0
    %1564 = vmatpush1.xpose.msra.mxu0 0.0
    %1565 = vmatprep.subr.mxu0 0.0
    %1566 = vmatpush1.xpose.msra.mxu0 0.0
    %1567 = vmatprep.subr.mxu0 0.0
    %1568 = vmatpush1.xpose.msra.mxu0 0.0
    %1569 = vmatprep.subr.mxu0 0.0
    %1570 = vmatpush1.xpose.msra.mxu0 0.0
    %1571 = vmatprep.subr.mxu0 0.0
    %1572 = vmatpush1.xpose.msra.mxu0 0.0
    %1573 = vmatprep.subr.mxu0 0.0
    %1574 = vmatpush1.xpose.msra.mxu0 0.0
    %1575 = vmatprep.subr.mxu0 0.0
    %1576 = vmatpush1.xpose.msra.mxu0 0.0
    %1577 = vmatprep.subr.mxu0 0.0
    %1578 = vmatpush1.xpose.msra.mxu0 0.0
    %1579 = vmatprep.subr.mxu0 0.0
    %1580 = vmatpush1.xpose.msra.mxu0 0.0
    %1581 = vmatprep.subr.mxu0 0.0
    %1582 = vmatpush1.xpose.msra.mxu0 0.0
    %1583 = vmatprep.subr.mxu0 0.0
    %1584 = vmatpush1.xpose.msra.mxu0 0.0
    %1585 = vmatprep.subr.mxu0 0.0
    %1586 = vmatpush1.xpose.msra.mxu0 0.0
    %1587 = vmatprep.subr.mxu0 0.0
    %1588 = vmatpush1.xpose.msra.mxu0 0.0
    %1589 = vmatprep.subr.mxu0 0.0
    %1590 = vmatpush1.xpose.msra.mxu0 0.0
    %1591 = vmatprep.subr.mxu0 0.0
    %1592 = vmatpush1.xpose.msra.mxu0 0.0
    %1593 = vmatprep.subr.mxu0 0.0
    %1594 = vmatpush1.xpose.msra.mxu0 0.0
    %1595 = vmatprep.subr.mxu0 0.0
    %1596 = vmatpush1.xpose.msra.mxu0 0.0
    %1597 = vmatprep.subr.mxu0 0.0
    %1598 = vmatpush1.xpose.msra.mxu0 0.0
    %1599 = vmatprep.subr.mxu0 0.0
    %1600 = vmatpush1.xpose.msra.mxu0 0.0
    %1601 = vmatprep.subr.mxu0 0.0
    %1602 = vmatpush1.xpose.msra.mxu0 0.0
    %1603 = vmatprep.subr.mxu0 0.0
    %1604 = vmatpush1.xpose.msra.mxu0 0.0
    %1605 = vmatprep.subr.mxu0 0.0
    %1606 = vmatpush1.xpose.msra.mxu0 0.0
    %1607 = vmatprep.subr.mxu0 0.0
    %1608 = vmatpush1.xpose.msra.mxu0 0.0
    %1609 = vmatprep.subr.mxu0 0.0
    %1610 = vmatpush1.xpose.msra.mxu0 0.0
    %1611 = vmatprep.mubr.f32.mxu0 0.0
    %1612 = vmatmul.mubr.f32.gmra.mrb[0].mxu0 %v1542
    %v1613 = vpop.f32.mrb[0].mxu0
    %v1614 = vadd.f32 0.0, %v1613
    %v1615 = vpop.f32.mrb[0].mxu0
    %1616 = vdwg.mxu0
    %v1618 = vsel %vm1236, %v431, 0
    %v1621 = vsel %vm1236, %v781, 0
    %1623 = vmatprep.subr.mxu0 0.0
    %1624 = vmatpush1.xpose.msra.mxu0 %v1621
    %1625 = vmatprep.subr.mxu0 0.0
    %1626 = vmatpush1.xpose.msra.mxu0 0.0
    %1627 = vmatprep.subr.mxu0 0.0
    %1628 = vmatpush1.xpose.msra.mxu0 0.0
    %1629 = vmatprep.subr.mxu0 0.0
    %1630 = vmatpush1.xpose.msra.mxu0 0.0
    %1631 = vmatprep.subr.mxu0 0.0
    %1632 = vmatpush1.xpose.msra.mxu0 0.0
    %1633 = vmatprep.subr.mxu0 0.0
    %1634 = vmatpush1.xpose.msra.mxu0 0.0
    %1635 = vmatprep.subr.mxu0 0.0
    %1636 = vmatpush1.xpose.msra.mxu0 0.0
    %1637 = vmatprep.subr.mxu0 0.0
    %1638 = vmatpush1.xpose.msra.mxu0 0.0
    %1639 = vmatprep.subr.mxu0 0.0
    %1640 = vmatpush1.xpose.msra.mxu0 0.0
    %1641 = vmatprep.subr.mxu0 0.0
    %1642 = vmatpush1.xpose.msra.mxu0 0.0
    %1643 = vmatprep.subr.mxu0 0.0
    %1644 = vmatpush1.xpose.msra.mxu0 0.0
    %1645 = vmatprep.subr.mxu0 0.0
    %1646 = vmatpush1.xpose.msra.mxu0 0.0
    %1647 = vmatprep.subr.mxu0 0.0
    %1648 = vmatpush1.xpose.msra.mxu0 0.0
    %1649 = vmatprep.subr.mxu0 0.0
    %1650 = vmatpush1.xpose.msra.mxu0 0.0
    %1651 = vmatprep.subr.mxu0 0.0
    %1652 = vmatpush1.xpose.msra.mxu0 0.0
    %1653 = vmatprep.subr.mxu0 0.0
    %1654 = vmatpush1.xpose.msra.mxu0 0.0
    %1655 = vmatprep.subr.mxu0 0.0
    %1656 = vmatpush1.xpose.msra.mxu0 0.0
    %1657 = vmatprep.subr.mxu0 0.0
    %1658 = vmatpush1.xpose.msra.mxu0 0.0
    %1659 = vmatprep.subr.mxu0 0.0
    %1660 = vmatpush1.xpose.msra.mxu0 0.0
    %1661 = vmatprep.subr.mxu0 0.0
    %1662 = vmatpush1.xpose.msra.mxu0 0.0
    %1663 = vmatprep.subr.mxu0 0.0
    %1664 = vmatpush1.xpose.msra.mxu0 0.0
    %1665 = vmatprep.subr.mxu0 0.0
    %1666 = vmatpush1.xpose.msra.mxu0 0.0
    %1667 = vmatprep.subr.mxu0 0.0
    %1668 = vmatpush1.xpose.msra.mxu0 0.0
    %1669 = vmatprep.subr.mxu0 0.0
    %1670 = vmatpush1.xpose.msra.mxu0 0.0
    %1671 = vmatprep.subr.mxu0 0.0
    %1672 = vmatpush1.xpose.msra.mxu0 0.0
    %1673 = vmatprep.subr.mxu0 0.0
    %1674 = vmatpush1.xpose.msra.mxu0 0.0
    %1675 = vmatprep.subr.mxu0 0.0
    %1676 = vmatpush1.xpose.msra.mxu0 0.0
    %1677 = vmatprep.subr.mxu0 0.0
    %1678 = vmatpush1.xpose.msra.mxu0 0.0
    %1679 = vmatprep.subr.mxu0 0.0
    %1680 = vmatpush1.xpose.msra.mxu0 0.0
    %1681 = vmatprep.subr.mxu0 0.0
    %1682 = vmatpush1.xpose.msra.mxu0 0.0
    %1683 = vmatprep.subr.mxu0 0.0
    %1684 = vmatpush1.xpose.msra.mxu0 0.0
    %1685 = vmatprep.subr.mxu0 0.0
    %1686 = vmatpush1.xpose.msra.mxu0 0.0
    %1687 = vmatprep.mubr.f32.mxu0 0.0
    %1688 = vmatmul.mubr.f32.gmra.mrb[0].mxu0 %v1618
    %v1689 = vpop.f32.mrb[0].mxu0
    %v1690 = vadd.f32 0.0, %v1689
    %v1691 = vpop.f32.mrb[0].mxu0
    %1692 = vdwg.mxu0
    %v1694 = vsel %vm1236, %v432, 0
    %v1697 = vsel %vm1236, %v782, 0
    %1699 = vmatprep.subr.mxu0 0.0
    %1700 = vmatpush1.xpose.msra.mxu0 %v1697
    %1701 = vmatprep.subr.mxu0 0.0
    %1702 = vmatpush1.xpose.msra.mxu0 0.0
    %1703 = vmatprep.subr.mxu0 0.0
    %1704 = vmatpush1.xpose.msra.mxu0 0.0
    %1705 = vmatprep.subr.mxu0 0.0
    %1706 = vmatpush1.xpose.msra.mxu0 0.0
    %1707 = vmatprep.subr.mxu0 0.0
    %1708 = vmatpush1.xpose.msra.mxu0 0.0
    %1709 = vmatprep.subr.mxu0 0.0
    %1710 = vmatpush1.xpose.msra.mxu0 0.0
    %1711 = vmatprep.subr.mxu0 0.0
    %1712 = vmatpush1.xpose.msra.mxu0 0.0
    %1713 = vmatprep.subr.mxu0 0.0
    %1714 = vmatpush1.xpose.msra.mxu0 0.0
    %1715 = vmatprep.subr.mxu0 0.0
    %1716 = vmatpush1.xpose.msra.mxu0 0.0
    %1717 = vmatprep.subr.mxu0 0.0
    %1718 = vmatpush1.xpose.msra.mxu0 0.0
    %1719 = vmatprep.subr.mxu0 0.0
    %1720 = vmatpush1.xpose.msra.mxu0 0.0
    %1721 = vmatprep.subr.mxu0 0.0
    %1722 = vmatpush1.xpose.msra.mxu0 0.0
    %1723 = vmatprep.subr.mxu0 0.0
    %1724 = vmatpush1.xpose.msra.mxu0 0.0
    %1725 = vmatprep.subr.mxu0 0.0
    %1726 = vmatpush1.xpose.msra.mxu0 0.0
    %1727 = vmatprep.subr.mxu0 0.0
    %1728 = vmatpush1.xpose.msra.mxu0 0.0
    %1729 = vmatprep.subr.mxu0 0.0
    %1730 = vmatpush1.xpose.msra.mxu0 0.0
    %1731 = vmatprep.subr.mxu0 0.0
    %1732 = vmatpush1.xpose.msra.mxu0 0.0
    %1733 = vmatprep.subr.mxu0 0.0
    %1734 = vmatpush1.xpose.msra.mxu0 0.0
    %1735 = vmatprep.subr.mxu0 0.0
    %1736 = vmatpush1.xpose.msra.mxu0 0.0
    %1737 = vmatprep.subr.mxu0 0.0
    %1738 = vmatpush1.xpose.msra.mxu0 0.0
    %1739 = vmatprep.subr.mxu0 0.0
    %1740 = vmatpush1.xpose.msra.mxu0 0.0
    %1741 = vmatprep.subr.mxu0 0.0
    %1742 = vmatpush1.xpose.msra.mxu0 0.0
    %1743 = vmatprep.subr.mxu0 0.0
    %1744 = vmatpush1.xpose.msra.mxu0 0.0
    %1745 = vmatprep.subr.mxu0 0.0
    %1746 = vmatpush1.xpose.msra.mxu0 0.0
    %1747 = vmatprep.subr.mxu0 0.0
    %1748 = vmatpush1.xpose.msra.mxu0 0.0
    %1749 = vmatprep.subr.mxu0 0.0
    %1750 = vmatpush1.xpose.msra.mxu0 0.0
    %1751 = vmatprep.subr.mxu0 0.0
    %1752 = vmatpush1.xpose.msra.mxu0 0.0
    %1753 = vmatprep.subr.mxu0 0.0
    %1754 = vmatpush1.xpose.msra.mxu0 0.0
    %1755 = vmatprep.subr.mxu0 0.0
    %1756 = vmatpush1.xpose.msra.mxu0 0.0
    %1757 = vmatprep.subr.mxu0 0.0
    %1758 = vmatpush1.xpose.msra.mxu0 0.0
    %1759 = vmatprep.subr.mxu0 0.0
    %1760 = vmatpush1.xpose.msra.mxu0 0.0
    %1761 = vmatprep.subr.mxu0 0.0
    %1762 = vmatpush1.xpose.msra.mxu0 0.0
    %1763 = vmatprep.mubr.f32.mxu0 0.0
    %1764 = vmatmul.mubr.f32.gmra.mrb[0].mxu0 %v1694
    %v1765 = vpop.f32.mrb[0].mxu0
    %v1766 = vadd.f32 0.0, %v1765
    %v1767 = vpop.f32.mrb[0].mxu0
    %1768 = vdwg.mxu0
    %v1770 = vsel %vm1236, %v433, 0
    %v1773 = vsel %vm1236, %v783, 0
    %1775 = vmatprep.subr.mxu0 0.0
    %1776 = vmatpush1.xpose.msra.mxu0 %v1773
    %1777 = vmatprep.subr.mxu0 0.0
    %1778 = vmatpush1.xpose.msra.mxu0 0.0
    %1779 = vmatprep.subr.mxu0 0.0
    %1780 = vmatpush1.xpose.msra.mxu0 0.0
    %1781 = vmatprep.subr.mxu0 0.0
    %1782 = vmatpush1.xpose.msra.mxu0 0.0
    %1783 = vmatprep.subr.mxu0 0.0
    %1784 = vmatpush1.xpose.msra.mxu0 0.0
    %1785 = vmatprep.subr.mxu0 0.0
    %1786 = vmatpush1.xpose.msra.mxu0 0.0
    %1787 = vmatprep.subr.mxu0 0.0
    %1788 = vmatpush1.xpose.msra.mxu0 0.0
    %1789 = vmatprep.subr.mxu0 0.0
    %1790 = vmatpush1.xpose.msra.mxu0 0.0
    %1791 = vmatprep.subr.mxu0 0.0
    %1792 = vmatpush1.xpose.msra.mxu0 0.0
    %1793 = vmatprep.subr.mxu0 0.0
    %1794 = vmatpush1.xpose.msra.mxu0 0.0
    %1795 = vmatprep.subr.mxu0 0.0
    %1796 = vmatpush1.xpose.msra.mxu0 0.0
    %1797 = vmatprep.subr.mxu0 0.0
    %1798 = vmatpush1.xpose.msra.mxu0 0.0
    %1799 = vmatprep.subr.mxu0 0.0
    %1800 = vmatpush1.xpose.msra.mxu0 0.0
    %1801 = vmatprep.subr.mxu0 0.0
    %1802 = vmatpush1.xpose.msra.mxu0 0.0
    %1803 = vmatprep.subr.mxu0 0.0
    %1804 = vmatpush1.xpose.msra.mxu0 0.0
    %1805 = vmatprep.subr.mxu0 0.0
    %1806 = vmatpush1.xpose.msra.mxu0 0.0
    %1807 = vmatprep.subr.mxu0 0.0
    %1808 = vmatpush1.xpose.msra.mxu0 0.0
    %1809 = vmatprep.subr.mxu0 0.0
    %1810 = vmatpush1.xpose.msra.mxu0 0.0
    %1811 = vmatprep.subr.mxu0 0.0
    %1812 = vmatpush1.xpose.msra.mxu0 0.0
    %1813 = vmatprep.subr.mxu0 0.0
    %1814 = vmatpush1.xpose.msra.mxu0 0.0
    %1815 = vmatprep.subr.mxu0 0.0
    %1816 = vmatpush1.xpose.msra.mxu0 0.0
    %1817 = vmatprep.subr.mxu0 0.0
    %1818 = vmatpush1.xpose.msra.mxu0 0.0
    %1819 = vmatprep.subr.mxu0 0.0
    %1820 = vmatpush1.xpose.msra.mxu0 0.0
    %1821 = vmatprep.subr.mxu0 0.0
    %1822 = vmatpush1.xpose.msra.mxu0 0.0
    %1823 = vmatprep.subr.mxu0 0.0
    %1824 = vmatpush1.xpose.msra.mxu0 0.0
    %1825 = vmatprep.subr.mxu0 0.0
    %1826 = vmatpush1.xpose.msra.mxu0 0.0
    %1827 = vmatprep.subr.mxu0 0.0
    %1828 = vmatpush1.xpose.msra.mxu0 0.0
    %1829 = vmatprep.subr.mxu0 0.0
    %1830 = vmatpush1.xpose.msra.mxu0 0.0
    %1831 = vmatprep.subr.mxu0 0.0
    %1832 = vmatpush1.xpose.msra.mxu0 0.0
    %1833 = vmatprep.subr.mxu0 0.0
    %1834 = vmatpush1.xpose.msra.mxu0 0.0
    %1835 = vmatprep.subr.mxu0 0.0
    %1836 = vmatpush1.xpose.msra.mxu0 0.0
    %1837 = vmatprep.subr.mxu0 0.0
    %1838 = vmatpush1.xpose.msra.mxu0 0.0
    %1839 = vmatprep.mubr.f32.mxu0 0.0
    %1840 = vmatmul.mubr.f32.gmra.mrb[0].mxu0 %v1770
    %v1841 = vpop.f32.mrb[0].mxu0
    %v1842 = vadd.f32 0.0, %v1841
    %v1843 = vpop.f32.mrb[0].mxu0
    %1844 = vdwg.mxu0
    %v1846 = vsel %vm1236, %v562, 0
    %v1849 = vsel %vm1236, %v912, 0
    %1851 = vmatprep.subr.mxu0 0.0
    %1852 = vmatpush1.xpose.msra.mxu0 %v1849
    %1853 = vmatprep.subr.mxu0 0.0
    %1854 = vmatpush1.xpose.msra.mxu0 0.0
    %1855 = vmatprep.subr.mxu0 0.0
    %1856 = vmatpush1.xpose.msra.mxu0 0.0
    %1857 = vmatprep.subr.mxu0 0.0
    %1858 = vmatpush1.xpose.msra.mxu0 0.0
    %1859 = vmatprep.subr.mxu0 0.0
    %1860 = vmatpush1.xpose.msra.mxu0 0.0
    %1861 = vmatprep.subr.mxu0 0.0
    %1862 = vmatpush1.xpose.msra.mxu0 0.0
    %1863 = vmatprep.subr.mxu0 0.0
    %1864 = vmatpush1.xpose.msra.mxu0 0.0
    %1865 = vmatprep.subr.mxu0 0.0
    %1866 = vmatpush1.xpose.msra.mxu0 0.0
    %1867 = vmatprep.subr.mxu0 0.0
    %1868 = vmatpush1.xpose.msra.mxu0 0.0
    %1869 = vmatprep.subr.mxu0 0.0
    %1870 = vmatpush1.xpose.msra.mxu0 0.0
    %1871 = vmatprep.subr.mxu0 0.0
    %1872 = vmatpush1.xpose.msra.mxu0 0.0
    %1873 = vmatprep.subr.mxu0 0.0
    %1874 = vmatpush1.xpose.msra.mxu0 0.0
    %1875 = vmatprep.subr.mxu0 0.0
    %1876 = vmatpush1.xpose.msra.mxu0 0.0
    %1877 = vmatprep.subr.mxu0 0.0
    %1878 = vmatpush1.xpose.msra.mxu0 0.0
    %1879 = vmatprep.subr.mxu0 0.0
    %1880 = vmatpush1.xpose.msra.mxu0 0.0
    %1881 = vmatprep.subr.mxu0 0.0
    %1882 = vmatpush1.xpose.msra.mxu0 0.0
    %1883 = vmatprep.subr.mxu0 0.0
    %1884 = vmatpush1.xpose.msra.mxu0 0.0
    %1885 = vmatprep.subr.mxu0 0.0
    %1886 = vmatpush1.xpose.msra.mxu0 0.0
    %1887 = vmatprep.subr.mxu0 0.0
    %1888 = vmatpush1.xpose.msra.mxu0 0.0
    %1889 = vmatprep.subr.mxu0 0.0
    %1890 = vmatpush1.xpose.msra.mxu0 0.0
    %1891 = vmatprep.subr.mxu0 0.0
    %1892 = vmatpush1.xpose.msra.mxu0 0.0
    %1893 = vmatprep.subr.mxu0 0.0
    %1894 = vmatpush1.xpose.msra.mxu0 0.0
    %1895 = vmatprep.subr.mxu0 0.0
    %1896 = vmatpush1.xpose.msra.mxu0 0.0
    %1897 = vmatprep.subr.mxu0 0.0
    %1898 = vmatpush1.xpose.msra.mxu0 0.0
    %1899 = vmatprep.subr.mxu0 0.0
    %1900 = vmatpush1.xpose.msra.mxu0 0.0
    %1901 = vmatprep.subr.mxu0 0.0
    %1902 = vmatpush1.xpose.msra.mxu0 0.0
    %1903 = vmatprep.subr.mxu0 0.0
    %1904 = vmatpush1.xpose.msra.mxu0 0.0
    %1905 = vmatprep.subr.mxu0 0.0
    %1906 = vmatpush1.xpose.msra.mxu0 0.0
    %1907 = vmatprep.subr.mxu0 0.0
    %1908 = vmatpush1.xpose.msra.mxu0 0.0
    %1909 = vmatprep.subr.mxu0 0.0
    %1910 = vmatpush1.xpose.msra.mxu0 0.0
    %1911 = vmatprep.subr.mxu0 0.0
    %1912 = vmatpush1.xpose.msra.mxu0 0.0
    %1913 = vmatprep.subr.mxu0 0.0
    %1914 = vmatpush1.xpose.msra.mxu0 0.0
    %1915 = vmatprep.mubr.f32.mxu0 0.0
    %1916 = vmatmul.mubr.f32.gmra.mrb[0].mxu0 %v1846
    %v1917 = vpop.f32.mrb[0].mxu0
    %v1918 = vadd.f32 0.0, %v1917
    %v1919 = vpop.f32.mrb[0].mxu0
    %1920 = vdwg.mxu0
    %v1922 = vsel %vm1236, %v563, 0
    %v1925 = vsel %vm1236, %v913, 0
    %1927 = vmatprep.subr.mxu0 0.0
    %1928 = vmatpush1.xpose.msra.mxu0 %v1925
    %1929 = vmatprep.subr.mxu0 0.0
    %1930 = vmatpush1.xpose.msra.mxu0 0.0
    %1931 = vmatprep.subr.mxu0 0.0
    %1932 = vmatpush1.xpose.msra.mxu0 0.0
    %1933 = vmatprep.subr.mxu0 0.0
    %1934 = vmatpush1.xpose.msra.mxu0 0.0
    %1935 = vmatprep.subr.mxu0 0.0
    %1936 = vmatpush1.xpose.msra.mxu0 0.0
    %1937 = vmatprep.subr.mxu0 0.0
    %1938 = vmatpush1.xpose.msra.mxu0 0.0
    %1939 = vmatprep.subr.mxu0 0.0
    %1940 = vmatpush1.xpose.msra.mxu0 0.0
    %1941 = vmatprep.subr.mxu0 0.0
    %1942 = vmatpush1.xpose.msra.mxu0 0.0
    %1943 = vmatprep.subr.mxu0 0.0
    %1944 = vmatpush1.xpose.msra.mxu0 0.0
    %1945 = vmatprep.subr.mxu0 0.0
    %1946 = vmatpush1.xpose.msra.mxu0 0.0
    %1947 = vmatprep.subr.mxu0 0.0
    %1948 = vmatpush1.xpose.msra.mxu0 0.0
    %1949 = vmatprep.subr.mxu0 0.0
    %1950 = vmatpush1.xpose.msra.mxu0 0.0
    %1951 = vmatprep.subr.mxu0 0.0
    %1952 = vmatpush1.xpose.msra.mxu0 0.0
    %1953 = vmatprep.subr.mxu0 0.0
    %1954 = vmatpush1.xpose.msra.mxu0 0.0
    %1955 = vmatprep.subr.mxu0 0.0
    %1956 = vmatpush1.xpose.msra.mxu0 0.0
    %1957 = vmatprep.subr.mxu0 0.0
    %1958 = vmatpush1.xpose.msra.mxu0 0.0
    %1959 = vmatprep.subr.mxu0 0.0
    %1960 = vmatpush1.xpose.msra.mxu0 0.0
    %1961 = vmatprep.subr.mxu0 0.0
    %1962 = vmatpush1.xpose.msra.mxu0 0.0
    %1963 = vmatprep.subr.mxu0 0.0
    %1964 = vmatpush1.xpose.msra.mxu0 0.0
    %1965 = vmatprep.subr.mxu0 0.0
    %1966 = vmatpush1.xpose.msra.mxu0 0.0
    %1967 = vmatprep.subr.mxu0 0.0
    %1968 = vmatpush1.xpose.msra.mxu0 0.0
    %1969 = vmatprep.subr.mxu0 0.0
    %1970 = vmatpush1.xpose.msra.mxu0 0.0
    %1971 = vmatprep.subr.mxu0 0.0
    %1972 = vmatpush1.xpose.msra.mxu0 0.0
    %1973 = vmatprep.subr.mxu0 0.0
    %1974 = vmatpush1.xpose.msra.mxu0 0.0
    %1975 = vmatprep.subr.mxu0 0.0
    %1976 = vmatpush1.xpose.msra.mxu0 0.0
    %1977 = vmatprep.subr.mxu0 0.0
    %1978 = vmatpush1.xpose.msra.mxu0 0.0
    %1979 = vmatprep.subr.mxu0 0.0
    %1980 = vmatpush1.xpose.msra.mxu0 0.0
    %1981 = vmatprep.subr.mxu0 0.0
    %1982 = vmatpush1.xpose.msra.mxu0 0.0
    %1983 = vmatprep.subr.mxu0 0.0
    %1984 = vmatpush1.xpose.msra.mxu0 0.0
    %1985 = vmatprep.subr.mxu0 0.0
    %1986 = vmatpush1.xpose.msra.mxu0 0.0
    %1987 = vmatprep.subr.mxu0 0.0
    %1988 = vmatpush1.xpose.msra.mxu0 0.0
    %1989 = vmatprep.subr.mxu0 0.0
    %1990 = vmatpush1.xpose.msra.mxu0 0.0
    %1991 = vmatprep.mubr.f32.mxu0 0.0
    %1992 = vmatmul.mubr.f32.gmra.mrb[0].mxu0 %v1922
    %v1993 = vpop.f32.mrb[0].mxu0
    %v1994 = vadd.f32 0.0, %v1993
    %v1995 = vpop.f32.mrb[0].mxu0
    %1996 = vdwg.mxu0
    %v1998 = vsel %vm1236, %v564, 0
    %v2001 = vsel %vm1236, %v914, 0
    %2003 = vmatprep.subr.mxu0 0.0
    %2004 = vmatpush1.xpose.msra.mxu0 %v2001
    %2005 = vmatprep.subr.mxu0 0.0
    %2006 = vmatpush1.xpose.msra.mxu0 0.0
    %2007 = vmatprep.subr.mxu0 0.0
    %2008 = vmatpush1.xpose.msra.mxu0 0.0
    %2009 = vmatprep.subr.mxu0 0.0
    %2010 = vmatpush1.xpose.msra.mxu0 0.0
    %2011 = vmatprep.subr.mxu0 0.0
    %2012 = vmatpush1.xpose.msra.mxu0 0.0
    %2013 = vmatprep.subr.mxu0 0.0
    %2014 = vmatpush1.xpose.msra.mxu0 0.0
    %2015 = vmatprep.subr.mxu0 0.0
    %2016 = vmatpush1.xpose.msra.mxu0 0.0
    %2017 = vmatprep.subr.mxu0 0.0
    %2018 = vmatpush1.xpose.msra.mxu0 0.0
    %2019 = vmatprep.subr.mxu0 0.0
    %2020 = vmatpush1.xpose.msra.mxu0 0.0
    %2021 = vmatprep.subr.mxu0 0.0
    %2022 = vmatpush1.xpose.msra.mxu0 0.0
    %2023 = vmatprep.subr.mxu0 0.0
    %2024 = vmatpush1.xpose.msra.mxu0 0.0
    %2025 = vmatprep.subr.mxu0 0.0
    %2026 = vmatpush1.xpose.msra.mxu0 0.0
    %2027 = vmatprep.subr.mxu0 0.0
    %2028 = vmatpush1.xpose.msra.mxu0 0.0
    %2029 = vmatprep.subr.mxu0 0.0
    %2030 = vmatpush1.xpose.msra.mxu0 0.0
    %2031 = vmatprep.subr.mxu0 0.0
    %2032 = vmatpush1.xpose.msra.mxu0 0.0
    %2033 = vmatprep.subr.mxu0 0.0
    %2034 = vmatpush1.xpose.msra.mxu0 0.0
    %2035 = vmatprep.subr.mxu0 0.0
    %2036 = vmatpush1.xpose.msra.mxu0 0.0
    %2037 = vmatprep.subr.mxu0 0.0
    %2038 = vmatpush1.xpose.msra.mxu0 0.0
    %2039 = vmatprep.subr.mxu0 0.0
    %2040 = vmatpush1.xpose.msra.mxu0 0.0
    %2041 = vmatprep.subr.mxu0 0.0
    %2042 = vmatpush1.xpose.msra.mxu0 0.0
    %2043 = vmatprep.subr.mxu0 0.0
    %2044 = vmatpush1.xpose.msra.mxu0 0.0
    %2045 = vmatprep.subr.mxu0 0.0
    %2046 = vmatpush1.xpose.msra.mxu0 0.0
    %2047 = vmatprep.subr.mxu0 0.0
    %2048 = vmatpush1.xpose.msra.mxu0 0.0
    %2049 = vmatprep.subr.mxu0 0.0
    %2050 = vmatpush1.xpose.msra.mxu0 0.0
    %2051 = vmatprep.subr.mxu0 0.0
    %2052 = vmatpush1.xpose.msra.mxu0 0.0
    %2053 = vmatprep.subr.mxu0 0.0
    %2054 = vmatpush1.xpose.msra.mxu0 0.0
    %2055 = vmatprep.subr.mxu0 0.0
    %2056 = vmatpush1.xpose.msra.mxu0 0.0
    %2057 = vmatprep.subr.mxu0 0.0
    %2058 = vmatpush1.xpose.msra.mxu0 0.0
    %2059 = vmatprep.subr.mxu0 0.0
    %2060 = vmatpush1.xpose.msra.mxu0 0.0
    %2061 = vmatprep.subr.mxu0 0.0
    %2062 = vmatpush1.xpose.msra.mxu0 0.0
    %2063 = vmatprep.subr.mxu0 0.0
    %2064 = vmatpush1.xpose.msra.mxu0 0.0
    %2065 = vmatprep.subr.mxu0 0.0
    %2066 = vmatpush1.xpose.msra.mxu0 0.0
    %2067 = vmatprep.mubr.f32.mxu0 0.0
    %2068 = vmatmul.mubr.f32.gmra.mrb[0].mxu0 %v1998
    %v2069 = vpop.f32.mrb[0].mxu0
    %v2070 = vadd.f32 0.0, %v2069
    %v2071 = vpop.f32.mrb[0].mxu0
    %2072 = vdwg.mxu0
    %v2074 = vsel %vm1236, %v565, 0
    %v2077 = vsel %vm1236, %v915, 0
    %2079 = vmatprep.subr.mxu0 0.0
    %2080 = vmatpush1.xpose.msra.mxu0 %v2077
    %2081 = vmatprep.subr.mxu0 0.0
    %2082 = vmatpush1.xpose.msra.mxu0 0.0
    %2083 = vmatprep.subr.mxu0 0.0
    %2084 = vmatpush1.xpose.msra.mxu0 0.0
    %2085 = vmatprep.subr.mxu0 0.0
    %2086 = vmatpush1.xpose.msra.mxu0 0.0
    %2087 = vmatprep.subr.mxu0 0.0
    %2088 = vmatpush1.xpose.msra.mxu0 0.0
    %2089 = vmatprep.subr.mxu0 0.0
    %2090 = vmatpush1.xpose.msra.mxu0 0.0
    %2091 = vmatprep.subr.mxu0 0.0
    %2092 = vmatpush1.xpose.msra.mxu0 0.0
    %2093 = vmatprep.subr.mxu0 0.0
    %2094 = vmatpush1.xpose.msra.mxu0 0.0
    %2095 = vmatprep.subr.mxu0 0.0
    %2096 = vmatpush1.xpose.msra.mxu0 0.0
    %2097 = vmatprep.subr.mxu0 0.0
    %2098 = vmatpush1.xpose.msra.mxu0 0.0
    %2099 = vmatprep.subr.mxu0 0.0
    %2100 = vmatpush1.xpose.msra.mxu0 0.0
    %2101 = vmatprep.subr.mxu0 0.0
    %2102 = vmatpush1.xpose.msra.mxu0 0.0
    %2103 = vmatprep.subr.mxu0 0.0
    %2104 = vmatpush1.xpose.msra.mxu0 0.0
    %2105 = vmatprep.subr.mxu0 0.0
    %2106 = vmatpush1.xpose.msra.mxu0 0.0
    %2107 = vmatprep.subr.mxu0 0.0
    %2108 = vmatpush1.xpose.msra.mxu0 0.0
    %2109 = vmatprep.subr.mxu0 0.0
    %2110 = vmatpush1.xpose.msra.mxu0 0.0
    %2111 = vmatprep.subr.mxu0 0.0
    %2112 = vmatpush1.xpose.msra.mxu0 0.0
    %2113 = vmatprep.subr.mxu0 0.0
    %2114 = vmatpush1.xpose.msra.mxu0 0.0
    %2115 = vmatprep.subr.mxu0 0.0
    %2116 = vmatpush1.xpose.msra.mxu0 0.0
    %2117 = vmatprep.subr.mxu0 0.0
    %2118 = vmatpush1.xpose.msra.mxu0 0.0
    %2119 = vmatprep.subr.mxu0 0.0
    %2120 = vmatpush1.xpose.msra.mxu0 0.0
    %2121 = vmatprep.subr.mxu0 0.0
    %2122 = vmatpush1.xpose.msra.mxu0 0.0
    %2123 = vmatprep.subr.mxu0 0.0
    %2124 = vmatpush1.xpose.msra.mxu0 0.0
    %2125 = vmatprep.subr.mxu0 0.0
    %2126 = vmatpush1.xpose.msra.mxu0 0.0
    %2127 = vmatprep.subr.mxu0 0.0
    %2128 = vmatpush1.xpose.msra.mxu0 0.0
    %2129 = vmatprep.subr.mxu0 0.0
    %2130 = vmatpush1.xpose.msra.mxu0 0.0
    %2131 = vmatprep.subr.mxu0 0.0
    %2132 = vmatpush1.xpose.msra.mxu0 0.0
    %2133 = vmatprep.subr.mxu0 0.0
    %2134 = vmatpush1.xpose.msra.mxu0 0.0
    %2135 = vmatprep.subr.mxu0 0.0
    %2136 = vmatpush1.xpose.msra.mxu0 0.0
    %2137 = vmatprep.subr.mxu0 0.0
    %2138 = vmatpush1.xpose.msra.mxu0 0.0
    %2139 = vmatprep.subr.mxu0 0.0
    %2140 = vmatpush1.xpose.msra.mxu0 0.0
    %2141 = vmatprep.subr.mxu0 0.0
    %2142 = vmatpush1.xpose.msra.mxu0 0.0
    %2143 = vmatprep.mubr.f32.mxu0 0.0
    %2144 = vmatmul.mubr.f32.gmra.mrb[0].mxu0 %v2074
    %v2145 = vpop.f32.mrb[0].mxu0
    %v2146 = vadd.f32 0.0, %v2145
    %v2147 = vpop.f32.mrb[0].mxu0
    %2148 = vdwg.mxu0
    %v2150 = vsel %vm1236, %v566, 0
    %v2153 = vsel %vm1236, %v916, 0
    %2155 = vmatprep.subr.mxu0 0.0
    %2156 = vmatpush1.xpose.msra.mxu0 %v2153
    %2157 = vmatprep.subr.mxu0 0.0
    %2158 = vmatpush1.xpose.msra.mxu0 0.0
    %2159 = vmatprep.subr.mxu0 0.0
    %2160 = vmatpush1.xpose.msra.mxu0 0.0
    %2161 = vmatprep.subr.mxu0 0.0
    %2162 = vmatpush1.xpose.msra.mxu0 0.0
    %2163 = vmatprep.subr.mxu0 0.0
    %2164 = vmatpush1.xpose.msra.mxu0 0.0
    %2165 = vmatprep.subr.mxu0 0.0
    %2166 = vmatpush1.xpose.msra.mxu0 0.0
    %2167 = vmatprep.subr.mxu0 0.0
    %2168 = vmatpush1.xpose.msra.mxu0 0.0
    %2169 = vmatprep.subr.mxu0 0.0
    %2170 = vmatpush1.xpose.msra.mxu0 0.0
    %2171 = vmatprep.subr.mxu0 0.0
    %2172 = vmatpush1.xpose.msra.mxu0 0.0
    %2173 = vmatprep.subr.mxu0 0.0
    %2174 = vmatpush1.xpose.msra.mxu0 0.0
    %2175 = vmatprep.subr.mxu0 0.0
    %2176 = vmatpush1.xpose.msra.mxu0 0.0
    %2177 = vmatprep.subr.mxu0 0.0
    %2178 = vmatpush1.xpose.msra.mxu0 0.0
    %2179 = vmatprep.subr.mxu0 0.0
    %2180 = vmatpush1.xpose.msra.mxu0 0.0
    %2181 = vmatprep.subr.mxu0 0.0
    %2182 = vmatpush1.xpose.msra.mxu0 0.0
    %2183 = vmatprep.subr.mxu0 0.0
    %2184 = vmatpush1.xpose.msra.mxu0 0.0
    %2185 = vmatprep.subr.mxu0 0.0
    %2186 = vmatpush1.xpose.msra.mxu0 0.0
    %2187 = vmatprep.subr.mxu0 0.0
    %2188 = vmatpush1.xpose.msra.mxu0 0.0
    %2189 = vmatprep.subr.mxu0 0.0
    %2190 = vmatpush1.xpose.msra.mxu0 0.0
    %2191 = vmatprep.subr.mxu0 0.0
    %2192 = vmatpush1.xpose.msra.mxu0 0.0
    %2193 = vmatprep.subr.mxu0 0.0
    %2194 = vmatpush1.xpose.msra.mxu0 0.0
    %2195 = vmatprep.subr.mxu0 0.0
    %2196 = vmatpush1.xpose.msra.mxu0 0.0
    %2197 = vmatprep.subr.mxu0 0.0
    %2198 = vmatpush1.xpose.msra.mxu0 0.0
    %2199 = vmatprep.subr.mxu0 0.0
    %2200 = vmatpush1.xpose.msra.mxu0 0.0
    %2201 = vmatprep.subr.mxu0 0.0
    %2202 = vmatpush1.xpose.msra.mxu0 0.0
    %2203 = vmatprep.subr.mxu0 0.0
    %2204 = vmatpush1.xpose.msra.mxu0 0.0
    %2205 = vmatprep.subr.mxu0 0.0
    %2206 = vmatpush1.xpose.msra.mxu0 0.0
    %2207 = vmatprep.subr.mxu0 0.0
    %2208 = vmatpush1.xpose.msra.mxu0 0.0
    %2209 = vmatprep.subr.mxu0 0.0
    %2210 = vmatpush1.xpose.msra.mxu0 0.0
    %2211 = vmatprep.subr.mxu0 0.0
    %2212 = vmatpush1.xpose.msra.mxu0 0.0
    %2213 = vmatprep.subr.mxu0 0.0
    %2214 = vmatpush1.xpose.msra.mxu0 0.0
    %2215 = vmatprep.subr.mxu0 0.0
    %2216 = vmatpush1.xpose.msra.mxu0 0.0
    %2217 = vmatprep.subr.mxu0 0.0
    %2218 = vmatpush1.xpose.msra.mxu0 0.0
    %2219 = vmatprep.mubr.f32.mxu0 0.0
    %2220 = vmatmul.mubr.f32.gmra.mrb[0].mxu0 %v2150
    %v2221 = vpop.f32.mrb[0].mxu0
    %v2222 = vadd.f32 0.0, %v2221
    %v2223 = vpop.f32.mrb[0].mxu0
    %2224 = vdwg.mxu0
    %v2226 = vsel %vm1236, %v567, 0
    %v2229 = vsel %vm1236, %v917, 0
    %2231 = vmatprep.subr.mxu0 0.0
    %2232 = vmatpush1.xpose.msra.mxu0 %v2229
    %2233 = vmatprep.subr.mxu0 0.0
    %2234 = vmatpush1.xpose.msra.mxu0 0.0
    %2235 = vmatprep.subr.mxu0 0.0
    %2236 = vmatpush1.xpose.msra.mxu0 0.0
    %2237 = vmatprep.subr.mxu0 0.0
    %2238 = vmatpush1.xpose.msra.mxu0 0.0
    %2239 = vmatprep.subr.mxu0 0.0
    %2240 = vmatpush1.xpose.msra.mxu0 0.0
    %2241 = vmatprep.subr.mxu0 0.0
    %2242 = vmatpush1.xpose.msra.mxu0 0.0
    %2243 = vmatprep.subr.mxu0 0.0
    %2244 = vmatpush1.xpose.msra.mxu0 0.0
    %2245 = vmatprep.subr.mxu0 0.0
    %2246 = vmatpush1.xpose.msra.mxu0 0.0
    %2247 = vmatprep.subr.mxu0 0.0
    %2248 = vmatpush1.xpose.msra.mxu0 0.0
    %2249 = vmatprep.subr.mxu0 0.0
    %2250 = vmatpush1.xpose.msra.mxu0 0.0
    %2251 = vmatprep.subr.mxu0 0.0
    %2252 = vmatpush1.xpose.msra.mxu0 0.0
    %2253 = vmatprep.subr.mxu0 0.0
    %2254 = vmatpush1.xpose.msra.mxu0 0.0
    %2255 = vmatprep.subr.mxu0 0.0
    %2256 = vmatpush1.xpose.msra.mxu0 0.0
    %2257 = vmatprep.subr.mxu0 0.0
    %2258 = vmatpush1.xpose.msra.mxu0 0.0
    %2259 = vmatprep.subr.mxu0 0.0
    %2260 = vmatpush1.xpose.msra.mxu0 0.0
    %2261 = vmatprep.subr.mxu0 0.0
    %2262 = vmatpush1.xpose.msra.mxu0 0.0
    %2263 = vmatprep.subr.mxu0 0.0
    %2264 = vmatpush1.xpose.msra.mxu0 0.0
    %2265 = vmatprep.subr.mxu0 0.0
    %2266 = vmatpush1.xpose.msra.mxu0 0.0
    %2267 = vmatprep.subr.mxu0 0.0
    %2268 = vmatpush1.xpose.msra.mxu0 0.0
    %2269 = vmatprep.subr.mxu0 0.0
    %2270 = vmatpush1.xpose.msra.mxu0 0.0
    %2271 = vmatprep.subr.mxu0 0.0
    %2272 = vmatpush1.xpose.msra.mxu0 0.0
    %2273 = vmatprep.subr.mxu0 0.0
    %2274 = vmatpush1.xpose.msra.mxu0 0.0
    %2275 = vmatprep.subr.mxu0 0.0
    %2276 = vmatpush1.xpose.msra.mxu0 0.0
    %2277 = vmatprep.subr.mxu0 0.0
    %2278 = vmatpush1.xpose.msra.mxu0 0.0
    %2279 = vmatprep.subr.mxu0 0.0
    %2280 = vmatpush1.xpose.msra.mxu0 0.0
    %2281 = vmatprep.subr.mxu0 0.0
    %2282 = vmatpush1.xpose.msra.mxu0 0.0
    %2283 = vmatprep.subr.mxu0 0.0
    %2284 = vmatpush1.xpose.msra.mxu0 0.0
    %2285 = vmatprep.subr.mxu0 0.0
    %2286 = vmatpush1.xpose.msra.mxu0 0.0
    %2287 = vmatprep.subr.mxu0 0.0
    %2288 = vmatpush1.xpose.msra.mxu0 0.0
    %2289 = vmatprep.subr.mxu0 0.0
    %2290 = vmatpush1.xpose.msra.mxu0 0.0
    %2291 = vmatprep.subr.mxu0 0.0
    %2292 = vmatpush1.xpose.msra.mxu0 0.0
    %2293 = vmatprep.subr.mxu0 0.0
    %2294 = vmatpush1.xpose.msra.mxu0 0.0
    %2295 = vmatprep.mubr.f32.mxu0 0.0
    %2296 = vmatmul.mubr.f32.gmra.mrb[0].mxu0 %v2226
    %v2297 = vpop.f32.mrb[0].mxu0
    %v2298 = vadd.f32 0.0, %v2297
    %v2299 = vpop.f32.mrb[0].mxu0
    %2300 = vdwg.mxu0
    %v2302 = vsel %vm1236, %v568, 0
    %v2305 = vsel %vm1236, %v918, 0
    %2307 = vmatprep.subr.mxu0 0.0
    %2308 = vmatpush1.xpose.msra.mxu0 %v2305
    %2309 = vmatprep.subr.mxu0 0.0
    %2310 = vmatpush1.xpose.msra.mxu0 0.0
    %2311 = vmatprep.subr.mxu0 0.0
    %2312 = vmatpush1.xpose.msra.mxu0 0.0
    %2313 = vmatprep.subr.mxu0 0.0
    %2314 = vmatpush1.xpose.msra.mxu0 0.0
    %2315 = vmatprep.subr.mxu0 0.0
    %2316 = vmatpush1.xpose.msra.mxu0 0.0
    %2317 = vmatprep.subr.mxu0 0.0
    %2318 = vmatpush1.xpose.msra.mxu0 0.0
    %2319 = vmatprep.subr.mxu0 0.0
    %2320 = vmatpush1.xpose.msra.mxu0 0.0
    %2321 = vmatprep.subr.mxu0 0.0
    %2322 = vmatpush1.xpose.msra.mxu0 0.0
    %2323 = vmatprep.subr.mxu0 0.0
    %2324 = vmatpush1.xpose.msra.mxu0 0.0
    %2325 = vmatprep.subr.mxu0 0.0
    %2326 = vmatpush1.xpose.msra.mxu0 0.0
    %2327 = vmatprep.subr.mxu0 0.0
    %2328 = vmatpush1.xpose.msra.mxu0 0.0
    %2329 = vmatprep.subr.mxu0 0.0
    %2330 = vmatpush1.xpose.msra.mxu0 0.0
    %2331 = vmatprep.subr.mxu0 0.0
    %2332 = vmatpush1.xpose.msra.mxu0 0.0
    %2333 = vmatprep.subr.mxu0 0.0
    %2334 = vmatpush1.xpose.msra.mxu0 0.0
    %2335 = vmatprep.subr.mxu0 0.0
    %2336 = vmatpush1.xpose.msra.mxu0 0.0
    %2337 = vmatprep.subr.mxu0 0.0
    %2338 = vmatpush1.xpose.msra.mxu0 0.0
    %2339 = vmatprep.subr.mxu0 0.0
    %2340 = vmatpush1.xpose.msra.mxu0 0.0
    %2341 = vmatprep.subr.mxu0 0.0
    %2342 = vmatpush1.xpose.msra.mxu0 0.0
    %2343 = vmatprep.subr.mxu0 0.0
    %2344 = vmatpush1.xpose.msra.mxu0 0.0
    %2345 = vmatprep.subr.mxu0 0.0
    %2346 = vmatpush1.xpose.msra.mxu0 0.0
    %2347 = vmatprep.subr.mxu0 0.0
    %2348 = vmatpush1.xpose.msra.mxu0 0.0
    %2349 = vmatprep.subr.mxu0 0.0
    %2350 = vmatpush1.xpose.msra.mxu0 0.0
    %2351 = vmatprep.subr.mxu0 0.0
    %2352 = vmatpush1.xpose.msra.mxu0 0.0
    %2353 = vmatprep.subr.mxu0 0.0
    %2354 = vmatpush1.xpose.msra.mxu0 0.0
    %2355 = vmatprep.subr.mxu0 0.0
    %2356 = vmatpush1.xpose.msra.mxu0 0.0
    %2357 = vmatprep.subr.mxu0 0.0
    %2358 = vmatpush1.xpose.msra.mxu0 0.0
    %2359 = vmatprep.subr.mxu0 0.0
    %2360 = vmatpush1.xpose.msra.mxu0 0.0
    %2361 = vmatprep.subr.mxu0 0.0
    %2362 = vmatpush1.xpose.msra.mxu0 0.0
    %2363 = vmatprep.subr.mxu0 0.0
    %2364 = vmatpush1.xpose.msra.mxu0 0.0
    %2365 = vmatprep.subr.mxu0 0.0
    %2366 = vmatpush1.xpose.msra.mxu0 0.0
    %2367 = vmatprep.subr.mxu0 0.0
    %2368 = vmatpush1.xpose.msra.mxu0 0.0
    %2369 = vmatprep.subr.mxu0 0.0
    %2370 = vmatpush1.xpose.msra.mxu0 0.0
    %2371 = vmatprep.mubr.f32.mxu0 0.0
    %2372 = vmatmul.mubr.f32.gmra.mrb[0].mxu0 %v2302
    %v2373 = vpop.f32.mrb[0].mxu0
    %v2374 = vadd.f32 0.0, %v2373
    %v2375 = vpop.f32.mrb[0].mxu0
    %2376 = vdwg.mxu0
    %v2378 = vsel %vm1236, %v569, 0
    %v2381 = vsel %vm1236, %v919, 0
    %2383 = vmatprep.subr.mxu0 0.0
    %2384 = vmatpush1.xpose.msra.mxu0 %v2381
    %2385 = vmatprep.subr.mxu0 0.0
    %2386 = vmatpush1.xpose.msra.mxu0 0.0
    %2387 = vmatprep.subr.mxu0 0.0
    %2388 = vmatpush1.xpose.msra.mxu0 0.0
    %2389 = vmatprep.subr.mxu0 0.0
    %2390 = vmatpush1.xpose.msra.mxu0 0.0
    %2391 = vmatprep.subr.mxu0 0.0
    %2392 = vmatpush1.xpose.msra.mxu0 0.0
    %2393 = vmatprep.subr.mxu0 0.0
    %2394 = vmatpush1.xpose.msra.mxu0 0.0
    %2395 = vmatprep.subr.mxu0 0.0
    %2396 = vmatpush1.xpose.msra.mxu0 0.0
    %2397 = vmatprep.subr.mxu0 0.0
    %2398 = vmatpush1.xpose.msra.mxu0 0.0
    %2399 = vmatprep.subr.mxu0 0.0
    %2400 = vmatpush1.xpose.msra.mxu0 0.0
    %2401 = vmatprep.subr.mxu0 0.0
    %2402 = vmatpush1.xpose.msra.mxu0 0.0
    %2403 = vmatprep.subr.mxu0 0.0
    %2404 = vmatpush1.xpose.msra.mxu0 0.0
    %2405 = vmatprep.subr.mxu0 0.0
    %2406 = vmatpush1.xpose.msra.mxu0 0.0
    %2407 = vmatprep.subr.mxu0 0.0
    %2408 = vmatpush1.xpose.msra.mxu0 0.0
    %2409 = vmatprep.subr.mxu0 0.0
    %2410 = vmatpush1.xpose.msra.mxu0 0.0
    %2411 = vmatprep.subr.mxu0 0.0
    %2412 = vmatpush1.xpose.msra.mxu0 0.0
    %2413 = vmatprep.subr.mxu0 0.0
    %2414 = vmatpush1.xpose.msra.mxu0 0.0
    %2415 = vmatprep.subr.mxu0 0.0
    %2416 = vmatpush1.xpose.msra.mxu0 0.0
    %2417 = vmatprep.subr.mxu0 0.0
    %2418 = vmatpush1.xpose.msra.mxu0 0.0
    %2419 = vmatprep.subr.mxu0 0.0
    %2420 = vmatpush1.xpose.msra.mxu0 0.0
    %2421 = vmatprep.subr.mxu0 0.0
    %2422 = vmatpush1.xpose.msra.mxu0 0.0
    %2423 = vmatprep.subr.mxu0 0.0
    %2424 = vmatpush1.xpose.msra.mxu0 0.0
    %2425 = vmatprep.subr.mxu0 0.0
    %2426 = vmatpush1.xpose.msra.mxu0 0.0
    %2427 = vmatprep.subr.mxu0 0.0
    %2428 = vmatpush1.xpose.msra.mxu0 0.0
    %2429 = vmatprep.subr.mxu0 0.0
    %2430 = vmatpush1.xpose.msra.mxu0 0.0
    %2431 = vmatprep.subr.mxu0 0.0
    %2432 = vmatpush1.xpose.msra.mxu0 0.0
    %2433 = vmatprep.subr.mxu0 0.0
    %2434 = vmatpush1.xpose.msra.mxu0 0.0
    %2435 = vmatprep.subr.mxu0 0.0
    %2436 = vmatpush1.xpose.msra.mxu0 0.0
    %2437 = vmatprep.subr.mxu0 0.0
    %2438 = vmatpush1.xpose.msra.mxu0 0.0
    %2439 = vmatprep.subr.mxu0 0.0
    %2440 = vmatpush1.xpose.msra.mxu0 0.0
    %2441 = vmatprep.subr.mxu0 0.0
    %2442 = vmatpush1.xpose.msra.mxu0 0.0
    %2443 = vmatprep.subr.mxu0 0.0
    %2444 = vmatpush1.xpose.msra.mxu0 0.0
    %2445 = vmatprep.subr.mxu0 0.0
    %2446 = vmatpush1.xpose.msra.mxu0 0.0
    %2447 = vmatprep.mubr.f32.mxu0 0.0
    %2448 = vmatmul.mubr.f32.gmra.mrb[0].mxu0 %v2378
    %v2449 = vpop.f32.mrb[0].mxu0
    %v2450 = vadd.f32 0.0, %v2449
    %v2451 = vpop.f32.mrb[0].mxu0
    %2452 = vdwg.mxu0
    %v2453 = vmul.f32 %v1310, 0.125
    %v2454 = vmul.f32 %v1386, 0.125
    %v2455 = vmul.f32 %v1462, 0.125
    %v2456 = vmul.f32 %v1538, 0.125
    %v2457 = vmul.f32 %v1614, 0.125
    %v2458 = vmul.f32 %v1690, 0.125
    %v2459 = vmul.f32 %v1766, 0.125
    %v2460 = vmul.f32 %v1842, 0.125
    %v2461 = vmul.f32 %v1918, 0.125
    %v2462 = vmul.f32 %v1994, 0.125
    %v2463 = vmul.f32 %v2070, 0.125
    %v2464 = vmul.f32 %v2146, 0.125
    %v2465 = vmul.f32 %v2222, 0.125
    %v2466 = vmul.f32 %v2298, 0.125
    %v2467 = vmul.f32 %v2374, 0.125
    %v2468 = vmul.f32 %v2450, 0.125
    %v2469 = vsel %vm1236, %v2453, -inf
    %2470 = vmax.xlane.f32.xlu0 %v2469
    %v2471 = vpop.xlane.xlu0 %2470
    %v2472 = vsel %vm1236, %v2454, -inf
    %2473 = vmax.xlane.f32.xlu0 %v2472
    %v2474 = vpop.xlane.xlu0 %2473
    %v2475 = vsel %vm1236, %v2455, -inf
    %2476 = vmax.xlane.f32.xlu0 %v2475
    %v2477 = vpop.xlane.xlu0 %2476
    %v2478 = vsel %vm1236, %v2456, -inf
    %2479 = vmax.xlane.f32.xlu0 %v2478
    %v2480 = vpop.xlane.xlu0 %2479
    %v2481 = vsel %vm1236, %v2457, -inf
    %2482 = vmax.xlane.f32.xlu0 %v2481
    %v2483 = vpop.xlane.xlu0 %2482
    %v2484 = vsel %vm1236, %v2458, -inf
    %2485 = vmax.xlane.f32.xlu0 %v2484
    %v2486 = vpop.xlane.xlu0 %2485
    %v2487 = vsel %vm1236, %v2459, -inf
    %2488 = vmax.xlane.f32.xlu0 %v2487
    %v2489 = vpop.xlane.xlu0 %2488
    %v2490 = vsel %vm1236, %v2460, -inf
    %2491 = vmax.xlane.f32.xlu0 %v2490
    %v2492 = vpop.xlane.xlu0 %2491
    %v2493 = vsel %vm1236, %v2461, -inf
    %2494 = vmax.xlane.f32.xlu0 %v2493
    %v2495 = vpop.xlane.xlu0 %2494
    %v2496 = vsel %vm1236, %v2462, -inf
    %2497 = vmax.xlane.f32.xlu0 %v2496
    %v2498 = vpop.xlane.xlu0 %2497
    %v2499 = vsel %vm1236, %v2463, -inf
    %2500 = vmax.xlane.f32.xlu0 %v2499
    %v2501 = vpop.xlane.xlu0 %2500
    %v2502 = vsel %vm1236, %v2464, -inf
    %2503 = vmax.xlane.f32.xlu0 %v2502
    %v2504 = vpop.xlane.xlu0 %2503
    %v2505 = vsel %vm1236, %v2465, -inf
    %2506 = vmax.xlane.f32.xlu0 %v2505
    %v2507 = vpop.xlane.xlu0 %2506
    %v2508 = vsel %vm1236, %v2466, -inf
    %2509 = vmax.xlane.f32.xlu0 %v2508
    %v2510 = vpop.xlane.xlu0 %2509
    %v2511 = vsel %vm1236, %v2467, -inf
    %2512 = vmax.xlane.f32.xlu0 %v2511
    %v2513 = vpop.xlane.xlu0 %2512
    %v2514 = vsel %vm1236, %v2468, -inf
    %2515 = vmax.xlane.f32.xlu0 %v2514
    %v2516 = vpop.xlane.xlu0 %2515
    %v2517 = vsub.f32 %v2453, %v2471
    %v2518 = vsub.f32 %v2454, %v2474
    %v2519 = vsub.f32 %v2455, %v2477
    %v2520 = vsub.f32 %v2456, %v2480
    %v2521 = vsub.f32 %v2457, %v2483
    %v2522 = vsub.f32 %v2458, %v2486
    %v2523 = vsub.f32 %v2459, %v2489
    %v2524 = vsub.f32 %v2460, %v2492
    %v2525 = vsub.f32 %v2461, %v2495
    %v2526 = vsub.f32 %v2462, %v2498
    %v2527 = vsub.f32 %v2463, %v2501
    %v2528 = vsub.f32 %v2464, %v2504
    %v2529 = vsub.f32 %v2465, %v2507
    %v2530 = vsub.f32 %v2466, %v2510
    %v2531 = vsub.f32 %v2467, %v2513
    %v2532 = vsub.f32 %v2468, %v2516
    %v2533 = vmul.f32 %v2517, 1.442695
    %v2534 = vpow.pop %v2533
    %v2535 = vmul.f32 %v2518, 1.442695
    %v2536 = vpow.pop %v2535
    %v2537 = vmul.f32 %v2519, 1.442695
    %v2538 = vpow.pop %v2537
    %v2539 = vmul.f32 %v2520, 1.442695
    %v2540 = vpow.pop %v2539
    %v2541 = vmul.f32 %v2521, 1.442695
    %v2542 = vpow.pop %v2541
    %v2543 = vmul.f32 %v2522, 1.442695
    %v2544 = vpow.pop %v2543
    %v2545 = vmul.f32 %v2523, 1.442695
    %v2546 = vpow.pop %v2545
    %v2547 = vmul.f32 %v2524, 1.442695
    %v2548 = vpow.pop %v2547
    %v2549 = vmul.f32 %v2525, 1.442695
    %v2550 = vpow.pop %v2549
    %v2551 = vmul.f32 %v2526, 1.442695
    %v2552 = vpow.pop %v2551
    %v2553 = vmul.f32 %v2527, 1.442695
    %v2554 = vpow.pop %v2553
    %v2555 = vmul.f32 %v2528, 1.442695
    %v2556 = vpow.pop %v2555
    %v2557 = vmul.f32 %v2529, 1.442695
    %v2558 = vpow.pop %v2557
    %v2559 = vmul.f32 %v2530, 1.442695
    %v2560 = vpow.pop %v2559
    %v2561 = vmul.f32 %v2531, 1.442695
    %v2562 = vpow.pop %v2561
    %v2563 = vmul.f32 %v2532, 1.442695
    %v2564 = vpow.pop %v2563
    %v2565 = vsel %vm1236, %v2534, 0.0
    %2566 = vadd.xlane.f32.xlu0 %v2565
    %v2567 = vpop.xlane.xlu0 %2566
    %v2568 = vsel %vm1236, %v2536, 0.0
    %2569 = vadd.xlane.f32.xlu0 %v2568
    %v2570 = vpop.xlane.xlu0 %2569
    %v2571 = vsel %vm1236, %v2538, 0.0
    %2572 = vadd.xlane.f32.xlu0 %v2571
    %v2573 = vpop.xlane.xlu0 %2572
    %v2574 = vsel %vm1236, %v2540, 0.0
    %2575 = vadd.xlane.f32.xlu0 %v2574
    %v2576 = vpop.xlane.xlu0 %2575
    %v2577 = vsel %vm1236, %v2542, 0.0
    %2578 = vadd.xlane.f32.xlu0 %v2577
    %v2579 = vpop.xlane.xlu0 %2578
    %v2580 = vsel %vm1236, %v2544, 0.0
    %2581 = vadd.xlane.f32.xlu0 %v2580
    %v2582 = vpop.xlane.xlu0 %2581
    %v2583 = vsel %vm1236, %v2546, 0.0
    %2584 = vadd.xlane.f32.xlu0 %v2583
    %v2585 = vpop.xlane.xlu0 %2584
    %v2586 = vsel %vm1236, %v2548, 0.0
    %2587 = vadd.xlane.f32.xlu0 %v2586
    %v2588 = vpop.xlane.xlu0 %2587
    %v2589 = vsel %vm1236, %v2550, 0.0
    %2590 = vadd.xlane.f32.xlu0 %v2589
    %v2591 = vpop.xlane.xlu0 %2590
    %v2592 = vsel %vm1236, %v2552, 0.0
    %2593 = vadd.xlane.f32.xlu0 %v2592
    %v2594 = vpop.xlane.xlu0 %2593
    %v2595 = vsel %vm1236, %v2554, 0.0
    %2596 = vadd.xlane.f32.xlu0 %v2595
    %v2597 = vpop.xlane.xlu0 %2596
    %v2598 = vsel %vm1236, %v2556, 0.0
    %2599 = vadd.xlane.f32.xlu0 %v2598
    %v2600 = vpop.xlane.xlu0 %2599
    %v2601 = vsel %vm1236, %v2558, 0.0
    %2602 = vadd.xlane.f32.xlu0 %v2601
    %v2603 = vpop.xlane.xlu0 %2602
    %v2604 = vsel %vm1236, %v2560, 0.0
    %2605 = vadd.xlane.f32.xlu0 %v2604
    %v2606 = vpop.xlane.xlu0 %2605
    %v2607 = vsel %vm1236, %v2562, 0.0
    %2608 = vadd.xlane.f32.xlu0 %v2607
    %v2609 = vpop.xlane.xlu0 %2608
    %v2610 = vsel %vm1236, %v2564, 0.0
    %2611 = vadd.xlane.f32.xlu0 %v2610
    %v2612 = vpop.xlane.xlu0 %2611
    %v2613 = vrcp.pop %v2567
    %v2614 = vrcp.pop %v2570
    %v2615 = vrcp.pop %v2573
    %v2616 = vrcp.pop %v2576
    %v2617 = vrcp.pop %v2579
    %v2618 = vrcp.pop %v2582
    %v2619 = vrcp.pop %v2585
    %v2620 = vrcp.pop %v2588
    %v2621 = vrcp.pop %v2591
    %v2622 = vrcp.pop %v2594
    %v2623 = vrcp.pop %v2597
    %v2624 = vrcp.pop %v2600
    %v2625 = vrcp.pop %v2603
    %v2626 = vrcp.pop %v2606
    %v2627 = vrcp.pop %v2609
    %v2628 = vrcp.pop %v2612
    %v2629 = vmul.f32 %v2534, %v2613
    %v2630 = vmul.f32 %v2536, %v2614
    %v2631 = vmul.f32 %v2538, %v2615
    %v2632 = vmul.f32 %v2540, %v2616
    %v2633 = vmul.f32 %v2542, %v2617
    %v2634 = vmul.f32 %v2544, %v2618
    %v2635 = vmul.f32 %v2546, %v2619
    %v2636 = vmul.f32 %v2548, %v2620
    %v2637 = vmul.f32 %v2550, %v2621
    %v2638 = vmul.f32 %v2552, %v2622
    %v2639 = vmul.f32 %v2554, %v2623
    %v2640 = vmul.f32 %v2556, %v2624
    %v2641 = vmul.f32 %v2558, %v2625
    %v2642 = vmul.f32 %v2560, %v2626
    %v2643 = vmul.f32 %v2562, %v2627
    %v2644 = vmul.f32 %v2564, %v2628
    %v2645 = vmul.f32 %v2629, %v1092
    %v2646 = vmul.f32 %v2630, %v1093
    %v2647 = vmul.f32 %v2631, %v1094
    %v2648 = vmul.f32 %v2632, %v1095
    %v2649 = vmul.f32 %v2633, %v1096
    %v2650 = vmul.f32 %v2634, %v1097
    %v2651 = vmul.f32 %v2635, %v1098
    %v2652 = vmul.f32 %v2636, %v1099
    %v2653 = vmul.f32 %v2637, %v1228
    %v2654 = vmul.f32 %v2638, %v1229
    %v2655 = vmul.f32 %v2639, %v1230
    %v2656 = vmul.f32 %v2640, %v1231
    %v2657 = vmul.f32 %v2641, %v1232
    %v2658 = vmul.f32 %v2642, %v1233
    %v2659 = vmul.f32 %v2643, %v1234
    %v2660 = vmul.f32 %v2644, %v1235
    %v2661 = vcombine.low %v2645, %v2647
    %v2662 = vcombine.high %v2645, %v2647
    %v2664 = vunpack.c.l.s4 1983009808
    %v2665 = vunpack.c.0.s8 %v2664
    %v2666 = vlaneseq
    %v2667 = vshrl.u32 %v2666, 7
    %v2668 = vsub.s32 %v2665, %v2667
    %v2669 = vrot.slane %v2661, %v2668
    %v2671 = vunpack.c.l.s4 1983009808
    %v2672 = vunpack.c.0.s8 %v2671
    %v2673 = vlaneseq
    %v2674 = vshrl.u32 %v2673, 7
    %v2675 = vsub.s32 %v2672, %v2674
    %v2676 = vrot.slane %v2662, %v2675
    %v2677 = vcombine.low %v2646, %v2648
    %v2678 = vcombine.high %v2646, %v2648
    %v2680 = vunpack.c.l.s4 1983009808
    %v2681 = vunpack.c.0.s8 %v2680
    %v2682 = vlaneseq
    %v2683 = vshrl.u32 %v2682, 7
    %v2684 = vsub.s32 %v2681, %v2683
    %v2685 = vrot.slane %v2677, %v2684
    %v2687 = vunpack.c.l.s4 1983009808
    %v2688 = vunpack.c.0.s8 %v2687
    %v2689 = vlaneseq
    %v2690 = vshrl.u32 %v2689, 7
    %v2691 = vsub.s32 %v2688, %v2690
    %v2692 = vrot.slane %v2678, %v2691
    %v2693 = vcombine.low %v2649, %v2651
    %v2694 = vcombine.high %v2649, %v2651
    %v2696 = vunpack.c.l.s4 1983009808
    %v2697 = vunpack.c.0.s8 %v2696
    %v2698 = vlaneseq
    %v2699 = vshrl.u32 %v2698, 7
    %v2700 = vsub.s32 %v2697, %v2699
    %v2701 = vrot.slane %v2693, %v2700
    %v2703 = vunpack.c.l.s4 1983009808
    %v2704 = vunpack.c.0.s8 %v2703
    %v2705 = vlaneseq
    %v2706 = vshrl.u32 %v2705, 7
    %v2707 = vsub.s32 %v2704, %v2706
    %v2708 = vrot.slane %v2694, %v2707
    %v2709 = vcombine.low %v2650, %v2652
    %v2710 = vcombine.high %v2650, %v2652
    %v2712 = vunpack.c.l.s4 1983009808
    %v2713 = vunpack.c.0.s8 %v2712
    %v2714 = vlaneseq
    %v2715 = vshrl.u32 %v2714, 7
    %v2716 = vsub.s32 %v2713, %v2715
    %v2717 = vrot.slane %v2709, %v2716
    %v2719 = vunpack.c.l.s4 1983009808
    %v2720 = vunpack.c.0.s8 %v2719
    %v2721 = vlaneseq
    %v2722 = vshrl.u32 %v2721, 7
    %v2723 = vsub.s32 %v2720, %v2722
    %v2724 = vrot.slane %v2710, %v2723
    %v2725 = vcombine.low %v2669, %v2685
    %v2726 = vcombine.high %v2669, %v2685
    %v2728 = vunpack.c.l.s4 1934713408
    %v2729 = vunpack.c.0.s8 %v2728
    %v2730 = vlaneseq
    %v2731 = vshrl.u32 %v2730, 7
    %v2732 = vsub.s32 %v2729, %v2731
    %v2733 = vrot.slane %v2725, %v2732
    %v2735 = vunpack.c.l.s4 1934713408
    %v2736 = vunpack.c.0.s8 %v2735
    %v2737 = vlaneseq
    %v2738 = vshrl.u32 %v2737, 7
    %v2739 = vsub.s32 %v2736, %v2738
    %v2740 = vrot.slane %v2726, %v2739
    %v2741 = vcombine.low %v2676, %v2692
    %v2742 = vcombine.high %v2676, %v2692
    %v2744 = vunpack.c.l.s4 1934713408
    %v2745 = vunpack.c.0.s8 %v2744
    %v2746 = vlaneseq
    %v2747 = vshrl.u32 %v2746, 7
    %v2748 = vsub.s32 %v2745, %v2747
    %v2749 = vrot.slane %v2741, %v2748
    %v2751 = vunpack.c.l.s4 1934713408
    %v2752 = vunpack.c.0.s8 %v2751
    %v2753 = vlaneseq
    %v2754 = vshrl.u32 %v2753, 7
    %v2755 = vsub.s32 %v2752, %v2754
    %v2756 = vrot.slane %v2742, %v2755
    %v2757 = vcombine.low %v2701, %v2717
    %v2758 = vcombine.high %v2701, %v2717
    %v2760 = vunpack.c.l.s4 1934713408
    %v2761 = vunpack.c.0.s8 %v2760
    %v2762 = vlaneseq
    %v2763 = vshrl.u32 %v2762, 7
    %v2764 = vsub.s32 %v2761, %v2763
    %v2765 = vrot.slane %v2757, %v2764
    %v2767 = vunpack.c.l.s4 1934713408
    %v2768 = vunpack.c.0.s8 %v2767
    %v2769 = vlaneseq
    %v2770 = vshrl.u32 %v2769, 7
    %v2771 = vsub.s32 %v2768, %v2770
    %v2772 = vrot.slane %v2758, %v2771
    %v2773 = vcombine.low %v2708, %v2724
    %v2774 = vcombine.high %v2708, %v2724
    %v2776 = vunpack.c.l.s4 1934713408
    %v2777 = vunpack.c.0.s8 %v2776
    %v2778 = vlaneseq
    %v2779 = vshrl.u32 %v2778, 7
    %v2780 = vsub.s32 %v2777, %v2779
    %v2781 = vrot.slane %v2773, %v2780
    %v2783 = vunpack.c.l.s4 1934713408
    %v2784 = vunpack.c.0.s8 %v2783
    %v2785 = vlaneseq
    %v2786 = vshrl.u32 %v2785, 7
    %v2787 = vsub.s32 %v2784, %v2786
    %v2788 = vrot.slane %v2774, %v2787
    %v2789 = vcombine.low %v2733, %v2765
    %v2790 = vcombine.high %v2733, %v2765
    %v2791 = vcombine.low %v2740, %v2772
    %v2792 = vcombine.high %v2740, %v2772
    %v2793 = vcombine.low %v2749, %v2781
    %v2794 = vcombine.high %v2749, %v2781
    %v2795 = vcombine.low %v2756, %v2788
    %v2796 = vcombine.high %v2756, %v2788
    %v2797 = vcombine.low %v2653, %v2655
    %v2798 = vcombine.high %v2653, %v2655
    %v2800 = vunpack.c.l.s4 1983009808
    %v2801 = vunpack.c.0.s8 %v2800
    %v2802 = vlaneseq
    %v2803 = vshrl.u32 %v2802, 7
    %v2804 = vsub.s32 %v2801, %v2803
    %v2805 = vrot.slane %v2797, %v2804
    %v2807 = vunpack.c.l.s4 1983009808
    %v2808 = vunpack.c.0.s8 %v2807
    %v2809 = vlaneseq
    %v2810 = vshrl.u32 %v2809, 7
    %v2811 = vsub.s32 %v2808, %v2810
    %v2812 = vrot.slane %v2798, %v2811
    %v2813 = vcombine.low %v2654, %v2656
    %v2814 = vcombine.high %v2654, %v2656
    %v2816 = vunpack.c.l.s4 1983009808
    %v2817 = vunpack.c.0.s8 %v2816
    %v2818 = vlaneseq
    %v2819 = vshrl.u32 %v2818, 7
    %v2820 = vsub.s32 %v2817, %v2819
    %v2821 = vrot.slane %v2813, %v2820
    %v2823 = vunpack.c.l.s4 1983009808
    %v2824 = vunpack.c.0.s8 %v2823
    %v2825 = vlaneseq
    %v2826 = vshrl.u32 %v2825, 7
    %v2827 = vsub.s32 %v2824, %v2826
    %v2828 = vrot.slane %v2814, %v2827
    %v2829 = vcombine.low %v2657, %v2659
    %v2830 = vcombine.high %v2657, %v2659
    %v2832 = vunpack.c.l.s4 1983009808
    %v2833 = vunpack.c.0.s8 %v2832
    %v2834 = vlaneseq
    %v2835 = vshrl.u32 %v2834, 7
    %v2836 = vsub.s32 %v2833, %v2835
    %v2837 = vrot.slane %v2829, %v2836
    %v2839 = vunpack.c.l.s4 1983009808
    %v2840 = vunpack.c.0.s8 %v2839
    %v2841 = vlaneseq
    %v2842 = vshrl.u32 %v2841, 7
    %v2843 = vsub.s32 %v2840, %v2842
    %v2844 = vrot.slane %v2830, %v2843
    %v2845 = vcombine.low %v2658, %v2660
    %v2846 = vcombine.high %v2658, %v2660
    %v2848 = vunpack.c.l.s4 1983009808
    %v2849 = vunpack.c.0.s8 %v2848
    %v2850 = vlaneseq
    %v2851 = vshrl.u32 %v2850, 7
    %v2852 = vsub.s32 %v2849, %v2851
    %v2853 = vrot.slane %v2845, %v2852
    %v2855 = vunpack.c.l.s4 1983009808
    %v2856 = vunpack.c.0.s8 %v2855
    %v2857 = vlaneseq
    %v2858 = vshrl.u32 %v2857, 7
    %v2859 = vsub.s32 %v2856, %v2858
    %v2860 = vrot.slane %v2846, %v2859
    %v2861 = vcombine.low %v2805, %v2821
    %v2862 = vcombine.high %v2805, %v2821
    %v2864 = vunpack.c.l.s4 1934713408
    %v2865 = vunpack.c.0.s8 %v2864
    %v2866 = vlaneseq
    %v2867 = vshrl.u32 %v2866, 7
    %v2868 = vsub.s32 %v2865, %v2867
    %v2869 = vrot.slane %v2861, %v2868
    %v2871 = vunpack.c.l.s4 1934713408
    %v2872 = vunpack.c.0.s8 %v2871
    %v2873 = vlaneseq
    %v2874 = vshrl.u32 %v2873, 7
    %v2875 = vsub.s32 %v2872, %v2874
    %v2876 = vrot.slane %v2862, %v2875
    %v2877 = vcombine.low %v2812, %v2828
    %v2878 = vcombine.high %v2812, %v2828
    %v2880 = vunpack.c.l.s4 1934713408
    %v2881 = vunpack.c.0.s8 %v2880
    %v2882 = vlaneseq
    %v2883 = vshrl.u32 %v2882, 7
    %v2884 = vsub.s32 %v2881, %v2883
    %v2885 = vrot.slane %v2877, %v2884
    %v2887 = vunpack.c.l.s4 1934713408
    %v2888 = vunpack.c.0.s8 %v2887
    %v2889 = vlaneseq
    %v2890 = vshrl.u32 %v2889, 7
    %v2891 = vsub.s32 %v2888, %v2890
    %v2892 = vrot.slane %v2878, %v2891
    %v2893 = vcombine.low %v2837, %v2853
    %v2894 = vcombine.high %v2837, %v2853
    %v2896 = vunpack.c.l.s4 1934713408
    %v2897 = vunpack.c.0.s8 %v2896
    %v2898 = vlaneseq
    %v2899 = vshrl.u32 %v2898, 7
    %v2900 = vsub.s32 %v2897, %v2899
    %v2901 = vrot.slane %v2893, %v2900
    %v2903 = vunpack.c.l.s4 1934713408
    %v2904 = vunpack.c.0.s8 %v2903
    %v2905 = vlaneseq
    %v2906 = vshrl.u32 %v2905, 7
    %v2907 = vsub.s32 %v2904, %v2906
    %v2908 = vrot.slane %v2894, %v2907
    %v2909 = vcombine.low %v2844, %v2860
    %v2910 = vcombine.high %v2844, %v2860
    %v2912 = vunpack.c.l.s4 1934713408
    %v2913 = vunpack.c.0.s8 %v2912
    %v2914 = vlaneseq
    %v2915 = vshrl.u32 %v2914, 7
    %v2916 = vsub.s32 %v2913, %v2915
    %v2917 = vrot.slane %v2909, %v2916
    %v2919 = vunpack.c.l.s4 1934713408
    %v2920 = vunpack.c.0.s8 %v2919
    %v2921 = vlaneseq
    %v2922 = vshrl.u32 %v2921, 7
    %v2923 = vsub.s32 %v2920, %v2922
    %v2924 = vrot.slane %v2910, %v2923
    %v2925 = vcombine.low %v2869, %v2901
    %v2926 = vcombine.high %v2869, %v2901
    %v2927 = vcombine.low %v2876, %v2908
    %v2928 = vcombine.high %v2876, %v2908
    %v2929 = vcombine.low %v2885, %v2917
    %v2930 = vcombine.high %v2885, %v2917
    %v2931 = vcombine.low %v2892, %v2924
    %v2932 = vcombine.high %v2892, %v2924
    %2935 = vrot.lane.b32.xlu0 %v2790, 8
    %v2936 = vpop.permute.xlu0 %2935
    %2937 = vrot.lane.b32.xlu0 %v2926, 8
    %v2938 = vpop.permute.xlu0 %2937
    %2943 = vrot.lane.b32.xlu0 %v2791, 16
    %v2944 = vpop.permute.xlu0 %2943
    %2945 = vrot.lane.b32.xlu0 %v2927, 16
    %v2946 = vpop.permute.xlu0 %2945
    %2951 = vrot.lane.b32.xlu0 %v2792, 24
    %v2952 = vpop.permute.xlu0 %2951
    %2953 = vrot.lane.b32.xlu0 %v2928, 24
    %v2954 = vpop.permute.xlu0 %2953
    %2959 = vrot.lane.b32.xlu0 %v2793, 32
    %v2960 = vpop.permute.xlu0 %2959
    %2961 = vrot.lane.b32.xlu0 %v2929, 32
    %v2962 = vpop.permute.xlu0 %2961
    %2967 = vrot.lane.b32.xlu0 %v2794, 40
    %v2968 = vpop.permute.xlu0 %2967
    %2969 = vrot.lane.b32.xlu0 %v2930, 40
    %v2970 = vpop.permute.xlu0 %2969
    %2975 = vrot.lane.b32.xlu0 %v2795, 48
    %v2976 = vpop.permute.xlu0 %2975
    %2977 = vrot.lane.b32.xlu0 %v2931, 48
    %v2978 = vpop.permute.xlu0 %2977
    %2983 = vrot.lane.b32.xlu0 %v2796, 56
    %v2984 = vpop.permute.xlu0 %2983
    %2985 = vrot.lane.b32.xlu0 %v2932, 56
    %v2986 = vpop.permute.xlu0 %2985
    %v2989 = vsel %vm1236, %v2789, %v2936
    %v2990 = vsel %vm1236, %v2925, %v2938
    %vm2991 = vcmask 130048
    %v2992 = vsel %vm2991, %v2989, %v2944
    %v2993 = vsel %vm2991, %v2990, %v2946
    %vm2994 = vcmask 195584
    %v2995 = vsel %vm2994, %v2992, %v2952
    %v2996 = vsel %vm2994, %v2993, %v2954
    %vm2997 = vcmask 261120
    %v2998 = vsel %vm2997, %v2995, %v2960
    %v2999 = vsel %vm2997, %v2996, %v2962
    %vm3000 = vcmask 326656
    %v3001 = vsel %vm3000, %v2998, %v2968
    %v3002 = vsel %vm3000, %v2999, %v2970
    %vm3003 = vcmask 392192
    %v3004 = vsel %vm3003, %v3001, %v2976
    %v3005 = vsel %vm3003, %v3002, %v2978
    %vm3006 = vcmask 457728
    %v3007 = vsel %vm3006, %v3004, %v2984
    %v3008 = vsel %vm3006, %v3005, %v2986
    %3009 = vst.msk [vmem:[#allocation2] sm:$0xff] %vm45, %v3007
    %3010 = vst.msk [vmem:[#allocation2 + $0x8] sm:$0xff] %vm45, %v3008
    // Predicated region
    $region14: #{multi_head_attention.1} parent=1 // pred_check
      _
    $region15: #{multi_head_attention.1} parent=1 // pred_check_branch
      %3012 = sbr.rel (0) target = $region17
    $region16: #{multi_head_attention.1} parent=1 // pred_region
      %s3014 = ssub.s32 256, 256
      %3015 = vsyncadd [#allocation3], %s3014
      %s3016 = sshll.u32 [#allocation2], 4
      %s3017 = int_to_ptr.vmem [resolvable:$true] %s3016
      %3022 = dma.vmem_to_hbm [thread:$0]  %s3017, 256, %s3, [#allocation3], 128, 128, 8
    $region17: #{multi_head_attention.1} parent=1 // pred_fallthru
      _
    // Predicated region
    $region18: #{multi_head_attention.1} parent=1 // pred_check
      _
    $region19: #{multi_head_attention.1} parent=1 // pred_check_branch
      %3024 = sbr.rel (0) target = $region21
    $region20: #{multi_head_attention.1} parent=1 // pred_region
      %3025 = dma.done [#allocation3], 256
    $region21: #{multi_head_attention.1} parent=1 // pred_fallthru
      _
    %3026 = vsyncpa [#allocation3], 1

</llo_original>
